<compile_context>
chip_gen: v7x
topology: tpu7x:2x2x1
jax: 0.10.0
libtpu: 0.0.40
codegen_flags: <defaults>
</compile_context>

<pallas_src>
import functools

import jax
import jax.numpy as jnp
from jax import lax
from jax.experimental import pallas as pl
from jax.experimental.pallas import tpu as pltpu


def _lstm_kernel(gx_ref, wh_hbm, h_out_ref, c_out_ref,
                 wh_vmem, wh_sem, h_scr, c_scr,
                 *, hidden_pad, chunk, seq_len):
    ci = pl.program_id(0)
    Hp = hidden_pad

    @pl.when(ci == 0)
    def _init():
        # Single-buffered resident weight: DMA Wh (bf16) HBM -> VMEM once.
        cp = pltpu.make_async_copy(wh_hbm, wh_vmem, wh_sem)
        cp.start()
        cp.wait()
        h_scr[...] = jnp.zeros_like(h_scr)
        c_scr[...] = jnp.zeros_like(c_scr)

    wh = wh_vmem[...]                       # (Hp, 4*Hp) bf16, stays resident

    def _sigmoid(x):
        # exp on the EUP + approximate reciprocal (vrcp): divide stays off VPU.
        return pl.reciprocal(1.0 + jnp.exp(-x), approx=True)

    needs_mask = (seq_len % chunk) != 0     # static (time padded to chunk)

    def step(tt, carry):
        h, c = carry
        gx = gx_ref[tt]                     # (B, 4*Hp) f32 = x_t @ Wx + b
        gates = gx + jnp.dot(h.astype(jnp.bfloat16), wh,
                             preferred_element_type=jnp.float32)
        i_t = _sigmoid(gates[:, 0 * Hp:1 * Hp])
        f_t = _sigmoid(gates[:, 1 * Hp:2 * Hp])
        g_t = jnp.tanh(gates[:, 2 * Hp:3 * Hp])
        o_t = _sigmoid(gates[:, 3 * Hp:4 * Hp])
        c_new = f_t * c + i_t * g_t
        h_new = o_t * jnp.tanh(c_new)
        if needs_mask:                      # ignore zero-padded timesteps
            valid = (ci * chunk + tt) < seq_len
            h_new = jnp.where(valid, h_new, h)
            c_new = jnp.where(valid, c_new, c)
        return (h_new, c_new)

    h, c = lax.fori_loop(0, chunk, step, (h_scr[...], c_scr[...]),
                         unroll=True)
    h_scr[...] = h
    c_scr[...] = c

    @pl.when(ci == pl.num_programs(0) - 1)
    def _finalize():
        h_out_ref[...] = h.astype(h_out_ref.dtype)
        c_out_ref[...] = c.astype(c_out_ref.dtype)


def _round_up(n, m):
    return ((n + m - 1) // m) * m


def _pad_gate_cols(w, h, hp):
    """(..., 4*h) -> (..., 4*hp), zero-padding each gate's column block."""
    if hp == h:
        return w
    lead = w.shape[:-1]
    w4 = w.reshape(lead + (4, h))
    pad = [(0, 0)] * len(lead) + [(0, 0), (0, hp - h)]
    return jnp.pad(w4, pad).reshape(lead + (4 * hp,))


def lstm_pallas(x, wx, wh, b, *, chunk=16):
    """x: (batch, seq, feature); wx: (F, 4H); wh: (H, 4H); b: (4H,).

    Returns (h_T, c_T), each (batch, hidden), matching the PyTorch forward
    with zero initial states.
    """
    B, S, F = x.shape
    H = wh.shape[0]
    assert wx.shape == (F, 4 * H) and b.shape == (4 * H,)

    # Lane-align the hidden width so the four gate slices never cut inside a
    # (8,128) vreg tile.  Zero-padded gate columns provably stay zero.
    Hp = _round_up(H, 128)
    wx_p = _pad_gate_cols(wx, H, Hp)                                  # (F, 4Hp)
    b_p = _pad_gate_cols(b, H, Hp)                                    # (4Hp,)
    wh_p = _pad_gate_cols(jnp.pad(wh, ((0, Hp - H), (0, 0))), H, Hp)  # (Hp, 4Hp)
    wh_bf16 = wh_p.astype(jnp.bfloat16)

    # Hoisted input projection (no sequential dependency): one large matmul,
    # bias folded in -> the recurrent kernel only does h @ Wh per step.
    x_tm = jnp.transpose(x, (1, 0, 2)).astype(jnp.float32)            # (S, B, F)
    gates_x = jnp.einsum('sbf,fg->sbg', x_tm, wx_p,
                         preferred_element_type=jnp.float32) + b_p    # (S,B,4Hp)

    chunk = max(1, min(chunk, S))
    n_chunks = pl.cdiv(S, chunk)
    S_pad = n_chunks * chunk
    if S_pad != S:
        gates_x = jnp.pad(gates_x, ((0, S_pad - S), (0, 0), (0, 0)))

    kernel = functools.partial(_lstm_kernel, hidden_pad=Hp, chunk=chunk,
                               seq_len=S)

    # Explicit VMEM budget: double-buffered gate chunks + single-buffered Wh
    # + carries/outputs, with 2x headroom (clamped to sane scoped limits).
    bytes_gates = 2 * (chunk * B * 4 * Hp * 4)
    bytes_wh = Hp * 4 * Hp * 2
    bytes_state = 6 * B * Hp * 4
    vmem_budget = int(min(max(2 * (bytes_gates + bytes_wh + bytes_state),
                              32 * 1024 * 1024),
                          64 * 1024 * 1024))

    h_t, c_t = pl.pallas_call(
        kernel,
        out_shape=(jax.ShapeDtypeStruct((B, Hp), jnp.float32),
                   jax.ShapeDtypeStruct((B, Hp), jnp.float32)),
        grid_spec=pltpu.PrefetchScalarGridSpec(
            num_scalar_prefetch=0,
            grid=(n_chunks,),
            in_specs=[
                # Precomputed gate pre-activations, streamed chunk-by-chunk.
                pl.BlockSpec((chunk, B, 4 * Hp), lambda c: (c, 0, 0)),
                # Wh stays in HBM; the kernel DMAs it once into VMEM scratch.
                pl.BlockSpec(memory_space=pl.ANY),
            ],
            out_specs=(
                pl.BlockSpec((B, Hp), lambda c: (0, 0)),
                pl.BlockSpec((B, Hp), lambda c: (0, 0)),
            ),
            scratch_shapes=[
                pltpu.VMEM((Hp, 4 * Hp), jnp.bfloat16),   # resident Wh
                pltpu.SemaphoreType.DMA(()),              # its DMA semaphore
                pltpu.VMEM((B, Hp), jnp.float32),         # h carry
                pltpu.VMEM((B, Hp), jnp.float32),         # c carry
            ],
        ),
        compiler_params=pltpu.CompilerParams(
            dimension_semantics=("arbitrary",),           # time is sequential
            vmem_limit_bytes=vmem_budget),
    )(gates_x, wh_bf16)

    return h_t[:, :H], c_t[:, :H]


def _xavier_uniform(key, shape):
    fan_in, fan_out = shape
    bound = (6.0 / (fan_in + fan_out)) ** 0.5
    return jax.random.uniform(key, shape, jnp.float32, -bound, bound)


def make_params(key, input_size, hidden_size):
    """Matches LSTM.__init__/init_hidden: xavier_uniform weights, zero biases.

    Gate order [i, f, g, o]:
      Wx = concat([W_ii, W_if, W_ig, W_io], axis=1)  -> (F, 4H)
      Wh = concat([W_hi, W_hf, W_hg, W_ho], axis=1)  -> (H, 4H)
      b  = combined (b_i* + b_h*) biases             -> (4H,) (zeros)
    """
    keys = jax.random.split(key, 8)
    W_ii = _xavier_uniform(keys[0], (input_size, hidden_size))
    W_hi = _xavier_uniform(keys[1], (hidden_size, hidden_size))
    W_if = _xavier_uniform(keys[2], (input_size, hidden_size))
    W_hf = _xavier_uniform(keys[3], (hidden_size, hidden_size))
    W_ig = _xavier_uniform(keys[4], (input_size, hidden_size))
    W_hg = _xavier_uniform(keys[5], (hidden_size, hidden_size))
    W_io = _xavier_uniform(keys[6], (input_size, hidden_size))
    W_ho = _xavier_uniform(keys[7], (hidden_size, hidden_size))
    Wx = jnp.concatenate([W_ii, W_if, W_ig, W_io], axis=1)
    Wh = jnp.concatenate([W_hi, W_hf, W_hg, W_ho], axis=1)
    b = jnp.zeros((4 * hidden_size,), jnp.float32)   # biases are zero-init
    return Wx, Wh, b


def lstm_ref(x, wx, wh, b, *, matmul_dtype=jnp.float32):
    """Pure-JAX reference mirroring the PyTorch forward."""
    B, S, F = x.shape
    H = wh.shape[0]
    wh_m = wh.astype(matmul_dtype)

    def step(carry, x_t):
        h, c = carry
        gates = (x_t @ wx + b
                 + jnp.dot(h.astype(matmul_dtype), wh_m,
                           preferred_element_type=jnp.float32))
        i_t = jax.nn.sigmoid(gates[:, 0 * H:1 * H])
        f_t = jax.nn.sigmoid(gates[:, 1 * H:2 * H])
        g_t = jnp.tanh(gates[:, 2 * H:3 * H])
        o_t = jax.nn.sigmoid(gates[:, 3 * H:4 * H])
        c_new = f_t * c + i_t * g_t
        h_new = o_t * jnp.tanh(c_new)
        return (h_new, c_new), None

    init = (jnp.zeros((B, H), jnp.float32), jnp.zeros((B, H), jnp.float32))
    (h_T, c_T), _ = lax.scan(step, init, jnp.transpose(x, (1, 0, 2)))
    return h_T, c_T


if __name__ == "__main__":
    batch, seq, input_size, hidden_size = 2, 8, 16, 32

    key = jax.random.PRNGKey(0)
    k_x, k_p = jax.random.split(key)
    x = jax.random.normal(k_x, (batch, seq, input_size), jnp.float32)
    Wx, Wh, b = make_params(k_p, input_size, hidden_size)

    h_t, c_t = jax.jit(lstm_pallas)(x, Wx, Wh, b)
    jax.block_until_ready((h_t, c_t))

    assert h_t.shape == (batch, hidden_size)
    assert c_t.shape == (batch, hidden_size)

    # Exact-f32 reference: loose tolerance (kernel uses bf16 h@Wh on the MXU
    # and an approximate-reciprocal sigmoid).
    h_f32, c_f32 = lstm_ref(x, Wx, Wh, b)
    assert jnp.allclose(h_t, h_f32, atol=5e-2, rtol=0.0), \
        float(jnp.max(jnp.abs(h_t - h_f32)))
    assert jnp.allclose(c_t, c_f32, atol=5e-2, rtol=0.0), \
        float(jnp.max(jnp.abs(c_t - c_f32)))

    # bf16-matmul-matched reference: only approx-reciprocal differences left.
    h_bf, c_bf = lstm_ref(x, Wx, Wh, b, matmul_dtype=jnp.bfloat16)
    assert jnp.allclose(h_t, h_bf, atol=3e-2, rtol=0.0), \
        float(jnp.max(jnp.abs(h_t - h_bf)))
    assert jnp.allclose(c_t, c_bf, atol=3e-2, rtol=0.0), \
        float(jnp.max(jnp.abs(c_t - c_bf)))

    print("KERNEL_OK")
</pallas_src>

<mosaic_0001>
module attributes {stable_mosaic.version = 11 : i64} {
  func.func @_lstm_kernel(%arg0: i32, %arg1: memref<8x2x512xf32, #tpu.memory_space<vmem>>, %arg2: memref<128x512xbf16, #tpu.memory_space<any>>, %arg3: memref<2x128xf32, #tpu.memory_space<vmem>>, %arg4: memref<2x128xf32, #tpu.memory_space<vmem>>, %arg5: memref<128x512xbf16, #tpu.memory_space<vmem>>, %arg6: memref<!tpu.dma_semaphore, #tpu.memory_space<semaphore_mem>>, %arg7: memref<2x128xf32, #tpu.memory_space<vmem>>, %arg8: memref<2x128xf32, #tpu.memory_space<vmem>>) attributes {dimension_semantics = [#tpu.dimension_semantics<arbitrary>], iteration_bounds = array<i64: 1>, scalar_prefetch = 0 : i64, scratch_operands = 4 : i64, tpu.core_type = #tpu.core_type<tc>, window_params = [{transform_indices = @transform_0, window_bounds = array<i64: 8, 2, 512>}, {}, {pipeline_mode = #tpu.pipeline_mode<synchronous>, transform_indices = @transform_2, window_bounds = array<i64: 2, 128>}, {pipeline_mode = #tpu.pipeline_mode<synchronous>, transform_indices = @transform_3, window_bounds = array<i64: 2, 128>}]} {
    %c0_i32 = arith.constant 0 : i32
    %0 = arith.cmpi eq, %arg0, %c0_i32 : i32
    %1 = arith.extui %0 : i1 to i32
    %c0_i32_0 = arith.constant 0 : i32
    %2 = arith.cmpi ne, %1, %c0_i32_0 : i32
    scf.if %2 {
      tpu.enqueue_dma source(%arg2 : memref<128x512xbf16, #tpu.memory_space<any>>) target(%arg5 : memref<128x512xbf16, #tpu.memory_space<vmem>>) target_semaphore(%arg6 : memref<!tpu.dma_semaphore, #tpu.memory_space<semaphore_mem>>)
      tpu.wait_dma2 semaphore(%arg6 : memref<!tpu.dma_semaphore, #tpu.memory_space<semaphore_mem>>) src(%arg2 : memref<128x512xbf16, #tpu.memory_space<any>>) dst(%arg5 : memref<128x512xbf16, #tpu.memory_space<vmem>>)
      %cst_84 = arith.constant 0.000000e+00 : f32
      %283 = vector.broadcast %cst_84 : f32 to vector<2x128xf32>
      %c0_85 = arith.constant 0 : index
      %c0_86 = arith.constant 0 : index
      %284 = vector.load %arg7[%c0_85, %c0_86] : memref<2x128xf32, #tpu.memory_space<vmem>>, vector<2x128xf32>
      tpu.vector_store %arg7[%c0_85, %c0_86], %283 {strides = array<i32>} : memref<2x128xf32, #tpu.memory_space<vmem>>, vector<2x128xf32>,
      %cst_87 = arith.constant 0.000000e+00 : f32
      %285 = vector.broadcast %cst_87 : f32 to vector<2x128xf32>
      %c0_88 = arith.constant 0 : index
      %c0_89 = arith.constant 0 : index
      %286 = vector.load %arg8[%c0_88, %c0_89] : memref<2x128xf32, #tpu.memory_space<vmem>>, vector<2x128xf32>
      tpu.vector_store %arg8[%c0_88, %c0_89], %285 {strides = array<i32>} : memref<2x128xf32, #tpu.memory_space<vmem>>, vector<2x128xf32>,
    } else {
    }
    %c0 = arith.constant 0 : index
    %c0_1 = arith.constant 0 : index
    %3 = vector.load %arg5[%c0, %c0_1] : memref<128x512xbf16, #tpu.memory_space<vmem>>, vector<128x512xbf16>
    %c0_2 = arith.constant 0 : index
    %c0_3 = arith.constant 0 : index
    %4 = vector.load %arg7[%c0_2, %c0_3] : memref<2x128xf32, #tpu.memory_space<vmem>>, vector<2x128xf32>
    %c0_4 = arith.constant 0 : index
    %c0_5 = arith.constant 0 : index
    %5 = vector.load %arg8[%c0_4, %c0_5] : memref<2x128xf32, #tpu.memory_space<vmem>>, vector<2x128xf32>
    %c0_i32_6 = arith.constant 0 : i32
    %6 = arith.index_cast %c0_i32_6 : i32 to index
    %c0_7 = arith.constant 0 : index
    %c0_8 = arith.constant 0 : index
    %7 = vector.load %arg1[%6, %c0_7, %c0_8] : memref<8x2x512xf32, #tpu.memory_space<vmem>>, vector<1x2x512xf32>
    %8 = vector.shape_cast %7 : vector<1x2x512xf32> to vector<2x512xf32>
    %9 = arith.truncf %4 : vector<2x128xf32> to vector<2x128xbf16>
    %cst = arith.constant dense<0.000000e+00> : vector<2x512xf32>
    %10 = tpu.matmul %9, %3, %cst {dimension_numbers = #tpu.dot_dimension_numbers<[1], [0], [0], [1], [0, 0, 1, 1], [], []>} : vector<2x128xbf16>, vector<128x512xbf16>, vector<2x512xf32> -> vector<2x512xf32>
    %11 = arith.addf %8, %10 : vector<2x512xf32>
    %12 = vector.extract_strided_slice %11 {offsets = [0, 0], sizes = [2, 128], strides = [1, 1]} : vector<2x512xf32> to vector<2x128xf32>
    %cst_9 = arith.constant 0.000000e+00 : f32
    %13 = vector.broadcast %cst_9 : f32 to vector<2x128xf32>
    %14 = arith.subf %13, %12 : vector<2x128xf32>
    %15 = math.exp %14 : vector<2x128xf32>
    %cst_10 = arith.constant 1.000000e+00 : f32
    %16 = vector.broadcast %cst_10 : f32 to vector<2x128xf32>
    %17 = arith.addf %16, %15 : vector<2x128xf32>
    %18 = tpu.reciprocal %17 {approx = true} : vector<2x128xf32> -> vector<2x128xf32>
    %19 = vector.extract_strided_slice %11 {offsets = [0, 128], sizes = [2, 128], strides = [1, 1]} : vector<2x512xf32> to vector<2x128xf32>
    %cst_11 = arith.constant 0.000000e+00 : f32
    %20 = vector.broadcast %cst_11 : f32 to vector<2x128xf32>
    %21 = arith.subf %20, %19 : vector<2x128xf32>
    %22 = math.exp %21 : vector<2x128xf32>
    %cst_12 = arith.constant 1.000000e+00 : f32
    %23 = vector.broadcast %cst_12 : f32 to vector<2x128xf32>
    %24 = arith.addf %23, %22 : vector<2x128xf32>
    %25 = tpu.reciprocal %24 {approx = true} : vector<2x128xf32> -> vector<2x128xf32>
    %26 = vector.extract_strided_slice %11 {offsets = [0, 256], sizes = [2, 128], strides = [1, 1]} : vector<2x512xf32> to vector<2x128xf32>
    %27 = math.tanh %26 : vector<2x128xf32>
    %28 = vector.extract_strided_slice %11 {offsets = [0, 384], sizes = [2, 128], strides = [1, 1]} : vector<2x512xf32> to vector<2x128xf32>
    %cst_13 = arith.constant 0.000000e+00 : f32
    %29 = vector.broadcast %cst_13 : f32 to vector<2x128xf32>
    %30 = arith.subf %29, %28 : vector<2x128xf32>
    %31 = math.exp %30 : vector<2x128xf32>
    %cst_14 = arith.constant 1.000000e+00 : f32
    %32 = vector.broadcast %cst_14 : f32 to vector<2x128xf32>
    %33 = arith.addf %32, %31 : vector<2x128xf32>
    %34 = tpu.reciprocal %33 {approx = true} : vector<2x128xf32> -> vector<2x128xf32>
    %35 = arith.mulf %25, %5 : vector<2x128xf32>
    %36 = arith.mulf %18, %27 : vector<2x128xf32>
    %37 = arith.addf %35, %36 : vector<2x128xf32>
    %38 = math.tanh %37 : vector<2x128xf32>
    %39 = arith.mulf %34, %38 : vector<2x128xf32>
    %c1_i32 = arith.constant 1 : i32
    %40 = arith.index_cast %c1_i32 : i32 to index
    %c0_15 = arith.constant 0 : index
    %c0_16 = arith.constant 0 : index
    %41 = vector.load %arg1[%40, %c0_15, %c0_16] : memref<8x2x512xf32, #tpu.memory_space<vmem>>, vector<1x2x512xf32>
    %42 = vector.shape_cast %41 : vector<1x2x512xf32> to vector<2x512xf32>
    %43 = arith.truncf %39 : vector<2x128xf32> to vector<2x128xbf16>
    %cst_17 = arith.constant dense<0.000000e+00> : vector<2x512xf32>
    %44 = tpu.matmul %43, %3, %cst_17 {dimension_numbers = #tpu.dot_dimension_numbers<[1], [0], [0], [1], [0, 0, 1, 1], [], []>} : vector<2x128xbf16>, vector<128x512xbf16>, vector<2x512xf32> -> vector<2x512xf32>
    %45 = arith.addf %42, %44 : vector<2x512xf32>
    %46 = vector.extract_strided_slice %45 {offsets = [0, 0], sizes = [2, 128], strides = [1, 1]} : vector<2x512xf32> to vector<2x128xf32>
    %cst_18 = arith.constant 0.000000e+00 : f32
    %47 = vector.broadcast %cst_18 : f32 to vector<2x128xf32>
    %48 = arith.subf %47, %46 : vector<2x128xf32>
    %49 = math.exp %48 : vector<2x128xf32>
    %cst_19 = arith.constant 1.000000e+00 : f32
    %50 = vector.broadcast %cst_19 : f32 to vector<2x128xf32>
    %51 = arith.addf %50, %49 : vector<2x128xf32>
    %52 = tpu.reciprocal %51 {approx = true} : vector<2x128xf32> -> vector<2x128xf32>
    %53 = vector.extract_strided_slice %45 {offsets = [0, 128], sizes = [2, 128], strides = [1, 1]} : vector<2x512xf32> to vector<2x128xf32>
    %cst_20 = arith.constant 0.000000e+00 : f32
    %54 = vector.broadcast %cst_20 : f32 to vector<2x128xf32>
    %55 = arith.subf %54, %53 : vector<2x128xf32>
    %56 = math.exp %55 : vector<2x128xf32>
    %cst_21 = arith.constant 1.000000e+00 : f32
    %57 = vector.broadcast %cst_21 : f32 to vector<2x128xf32>
    %58 = arith.addf %57, %56 : vector<2x128xf32>
    %59 = tpu.reciprocal %58 {approx = true} : vector<2x128xf32> -> vector<2x128xf32>
    %60 = vector.extract_strided_slice %45 {offsets = [0, 256], sizes = [2, 128], strides = [1, 1]} : vector<2x512xf32> to vector<2x128xf32>
    %61 = math.tanh %60 : vector<2x128xf32>
    %62 = vector.extract_strided_slice %45 {offsets = [0, 384], sizes = [2, 128], strides = [1, 1]} : vector<2x512xf32> to vector<2x128xf32>
    %cst_22 = arith.constant 0.000000e+00 : f32
    %63 = vector.broadcast %cst_22 : f32 to vector<2x128xf32>
    %64 = arith.subf %63, %62 : vector<2x128xf32>
    %65 = math.exp %64 : vector<2x128xf32>
    %cst_23 = arith.constant 1.000000e+00 : f32
    %66 = vector.broadcast %cst_23 : f32 to vector<2x128xf32>
    %67 = arith.addf %66, %65 : vector<2x128xf32>
    %68 = tpu.reciprocal %67 {approx = true} : vector<2x128xf32> -> vector<2x128xf32>
    %69 = arith.mulf %59, %37 : vector<2x128xf32>
    %70 = arith.mulf %52, %61 : vector<2x128xf32>
    %71 = arith.addf %69, %70 : vector<2x128xf32>
    %72 = math.tanh %71 : vector<2x128xf32>
    %73 = arith.mulf %68, %72 : vector<2x128xf32>
    %c2_i32 = arith.constant 2 : i32
    %74 = arith.index_cast %c2_i32 : i32 to index
    %c0_24 = arith.constant 0 : index
    %c0_25 = arith.constant 0 : index
    %75 = vector.load %arg1[%74, %c0_24, %c0_25] : memref<8x2x512xf32, #tpu.memory_space<vmem>>, vector<1x2x512xf32>
    %76 = vector.shape_cast %75 : vector<1x2x512xf32> to vector<2x512xf32>
    %77 = arith.truncf %73 : vector<2x128xf32> to vector<2x128xbf16>
    %cst_26 = arith.constant dense<0.000000e+00> : vector<2x512xf32>
    %78 = tpu.matmul %77, %3, %cst_26 {dimension_numbers = #tpu.dot_dimension_numbers<[1], [0], [0], [1], [0, 0, 1, 1], [], []>} : vector<2x128xbf16>, vector<128x512xbf16>, vector<2x512xf32> -> vector<2x512xf32>
    %79 = arith.addf %76, %78 : vector<2x512xf32>
    %80 = vector.extract_strided_slice %79 {offsets = [0, 0], sizes = [2, 128], strides = [1, 1]} : vector<2x512xf32> to vector<2x128xf32>
    %cst_27 = arith.constant 0.000000e+00 : f32
    %81 = vector.broadcast %cst_27 : f32 to vector<2x128xf32>
    %82 = arith.subf %81, %80 : vector<2x128xf32>
    %83 = math.exp %82 : vector<2x128xf32>
    %cst_28 = arith.constant 1.000000e+00 : f32
    %84 = vector.broadcast %cst_28 : f32 to vector<2x128xf32>
    %85 = arith.addf %84, %83 : vector<2x128xf32>
    %86 = tpu.reciprocal %85 {approx = true} : vector<2x128xf32> -> vector<2x128xf32>
    %87 = vector.extract_strided_slice %79 {offsets = [0, 128], sizes = [2, 128], strides = [1, 1]} : vector<2x512xf32> to vector<2x128xf32>
    %cst_29 = arith.constant 0.000000e+00 : f32
    %88 = vector.broadcast %cst_29 : f32 to vector<2x128xf32>
    %89 = arith.subf %88, %87 : vector<2x128xf32>
    %90 = math.exp %89 : vector<2x128xf32>
    %cst_30 = arith.constant 1.000000e+00 : f32
    %91 = vector.broadcast %cst_30 : f32 to vector<2x128xf32>
    %92 = arith.addf %91, %90 : vector<2x128xf32>
    %93 = tpu.reciprocal %92 {approx = true} : vector<2x128xf32> -> vector<2x128xf32>
    %94 = vector.extract_strided_slice %79 {offsets = [0, 256], sizes = [2, 128], strides = [1, 1]} : vector<2x512xf32> to vector<2x128xf32>
    %95 = math.tanh %94 : vector<2x128xf32>
    %96 = vector.extract_strided_slice %79 {offsets = [0, 384], sizes = [2, 128], strides = [1, 1]} : vector<2x512xf32> to vector<2x128xf32>
    %cst_31 = arith.constant 0.000000e+00 : f32
    %97 = vector.broadcast %cst_31 : f32 to vector<2x128xf32>
    %98 = arith.subf %97, %96 : vector<2x128xf32>
    %99 = math.exp %98 : vector<2x128xf32>
    %cst_32 = arith.constant 1.000000e+00 : f32
    %100 = vector.broadcast %cst_32 : f32 to vector<2x128xf32>
    %101 = arith.addf %100, %99 : vector<2x128xf32>
    %102 = tpu.reciprocal %101 {approx = true} : vector<2x128xf32> -> vector<2x128xf32>
    %103 = arith.mulf %93, %71 : vector<2x128xf32>
    %104 = arith.mulf %86, %95 : vector<2x128xf32>
    %105 = arith.addf %103, %104 : vector<2x128xf32>
    %106 = math.tanh %105 : vector<2x128xf32>
    %107 = arith.mulf %102, %106 : vector<2x128xf32>
    %c3_i32 = arith.constant 3 : i32
    %108 = arith.index_cast %c3_i32 : i32 to index
    %c0_33 = arith.constant 0 : index
    %c0_34 = arith.constant 0 : index
    %109 = vector.load %arg1[%108, %c0_33, %c0_34] : memref<8x2x512xf32, #tpu.memory_space<vmem>>, vector<1x2x512xf32>
    %110 = vector.shape_cast %109 : vector<1x2x512xf32> to vector<2x512xf32>
    %111 = arith.truncf %107 : vector<2x128xf32> to vector<2x128xbf16>
    %cst_35 = arith.constant dense<0.000000e+00> : vector<2x512xf32>
    %112 = tpu.matmul %111, %3, %cst_35 {dimension_numbers = #tpu.dot_dimension_numbers<[1], [0], [0], [1], [0, 0, 1, 1], [], []>} : vector<2x128xbf16>, vector<128x512xbf16>, vector<2x512xf32> -> vector<2x512xf32>
    %113 = arith.addf %110, %112 : vector<2x512xf32>
    %114 = vector.extract_strided_slice %113 {offsets = [0, 0], sizes = [2, 128], strides = [1, 1]} : vector<2x512xf32> to vector<2x128xf32>
    %cst_36 = arith.constant 0.000000e+00 : f32
    %115 = vector.broadcast %cst_36 : f32 to vector<2x128xf32>
    %116 = arith.subf %115, %114 : vector<2x128xf32>
    %117 = math.exp %116 : vector<2x128xf32>
    %cst_37 = arith.constant 1.000000e+00 : f32
    %118 = vector.broadcast %cst_37 : f32 to vector<2x128xf32>
    %119 = arith.addf %118, %117 : vector<2x128xf32>
    %120 = tpu.reciprocal %119 {approx = true} : vector<2x128xf32> -> vector<2x128xf32>
    %121 = vector.extract_strided_slice %113 {offsets = [0, 128], sizes = [2, 128], strides = [1, 1]} : vector<2x512xf32> to vector<2x128xf32>
    %cst_38 = arith.constant 0.000000e+00 : f32
    %122 = vector.broadcast %cst_38 : f32 to vector<2x128xf32>
    %123 = arith.subf %122, %121 : vector<2x128xf32>
    %124 = math.exp %123 : vector<2x128xf32>
    %cst_39 = arith.constant 1.000000e+00 : f32
    %125 = vector.broadcast %cst_39 : f32 to vector<2x128xf32>
    %126 = arith.addf %125, %124 : vector<2x128xf32>
    %127 = tpu.reciprocal %126 {approx = true} : vector<2x128xf32> -> vector<2x128xf32>
    %128 = vector.extract_strided_slice %113 {offsets = [0, 256], sizes = [2, 128], strides = [1, 1]} : vector<2x512xf32> to vector<2x128xf32>
    %129 = math.tanh %128 : vector<2x128xf32>
    %130 = vector.extract_strided_slice %113 {offsets = [0, 384], sizes = [2, 128], strides = [1, 1]} : vector<2x512xf32> to vector<2x128xf32>
    %cst_40 = arith.constant 0.000000e+00 : f32
    %131 = vector.broadcast %cst_40 : f32 to vector<2x128xf32>
    %132 = arith.subf %131, %130 : vector<2x128xf32>
    %133 = math.exp %132 : vector<2x128xf32>
    %cst_41 = arith.constant 1.000000e+00 : f32
    %134 = vector.broadcast %cst_41 : f32 to vector<2x128xf32>
    %135 = arith.addf %134, %133 : vector<2x128xf32>
    %136 = tpu.reciprocal %135 {approx = true} : vector<2x128xf32> -> vector<2x128xf32>
    %137 = arith.mulf %127, %105 : vector<2x128xf32>
    %138 = arith.mulf %120, %129 : vector<2x128xf32>
    %139 = arith.addf %137, %138 : vector<2x128xf32>
    %140 = math.tanh %139 : vector<2x128xf32>
    %141 = arith.mulf %136, %140 : vector<2x128xf32>
    %c4_i32 = arith.constant 4 : i32
    %142 = arith.index_cast %c4_i32 : i32 to index
    %c0_42 = arith.constant 0 : index
    %c0_43 = arith.constant 0 : index
    %143 = vector.load %arg1[%142, %c0_42, %c0_43] : memref<8x2x512xf32, #tpu.memory_space<vmem>>, vector<1x2x512xf32>
    %144 = vector.shape_cast %143 : vector<1x2x512xf32> to vector<2x512xf32>
    %145 = arith.truncf %141 : vector<2x128xf32> to vector<2x128xbf16>
    %cst_44 = arith.constant dense<0.000000e+00> : vector<2x512xf32>
    %146 = tpu.matmul %145, %3, %cst_44 {dimension_numbers = #tpu.dot_dimension_numbers<[1], [0], [0], [1], [0, 0, 1, 1], [], []>} : vector<2x128xbf16>, vector<128x512xbf16>, vector<2x512xf32> -> vector<2x512xf32>
    %147 = arith.addf %144, %146 : vector<2x512xf32>
    %148 = vector.extract_strided_slice %147 {offsets = [0, 0], sizes = [2, 128], strides = [1, 1]} : vector<2x512xf32> to vector<2x128xf32>
    %cst_45 = arith.constant 0.000000e+00 : f32
    %149 = vector.broadcast %cst_45 : f32 to vector<2x128xf32>
    %150 = arith.subf %149, %148 : vector<2x128xf32>
    %151 = math.exp %150 : vector<2x128xf32>
    %cst_46 = arith.constant 1.000000e+00 : f32
    %152 = vector.broadcast %cst_46 : f32 to vector<2x128xf32>
    %153 = arith.addf %152, %151 : vector<2x128xf32>
    %154 = tpu.reciprocal %153 {approx = true} : vector<2x128xf32> -> vector<2x128xf32>
    %155 = vector.extract_strided_slice %147 {offsets = [0, 128], sizes = [2, 128], strides = [1, 1]} : vector<2x512xf32> to vector<2x128xf32>
    %cst_47 = arith.constant 0.000000e+00 : f32
    %156 = vector.broadcast %cst_47 : f32 to vector<2x128xf32>
    %157 = arith.subf %156, %155 : vector<2x128xf32>
    %158 = math.exp %157 : vector<2x128xf32>
    %cst_48 = arith.constant 1.000000e+00 : f32
    %159 = vector.broadcast %cst_48 : f32 to vector<2x128xf32>
    %160 = arith.addf %159, %158 : vector<2x128xf32>
    %161 = tpu.reciprocal %160 {approx = true} : vector<2x128xf32> -> vector<2x128xf32>
    %162 = vector.extract_strided_slice %147 {offsets = [0, 256], sizes = [2, 128], strides = [1, 1]} : vector<2x512xf32> to vector<2x128xf32>
    %163 = math.tanh %162 : vector<2x128xf32>
    %164 = vector.extract_strided_slice %147 {offsets = [0, 384], sizes = [2, 128], strides = [1, 1]} : vector<2x512xf32> to vector<2x128xf32>
    %cst_49 = arith.constant 0.000000e+00 : f32
    %165 = vector.broadcast %cst_49 : f32 to vector<2x128xf32>
    %166 = arith.subf %165, %164 : vector<2x128xf32>
    %167 = math.exp %166 : vector<2x128xf32>
    %cst_50 = arith.constant 1.000000e+00 : f32
    %168 = vector.broadcast %cst_50 : f32 to vector<2x128xf32>
    %169 = arith.addf %168, %167 : vector<2x128xf32>
    %170 = tpu.reciprocal %169 {approx = true} : vector<2x128xf32> -> vector<2x128xf32>
    %171 = arith.mulf %161, %139 : vector<2x128xf32>
    %172 = arith.mulf %154, %163 : vector<2x128xf32>
    %173 = arith.addf %171, %172 : vector<2x128xf32>
    %174 = math.tanh %173 : vector<2x128xf32>
    %175 = arith.mulf %170, %174 : vector<2x128xf32>
    %c5_i32 = arith.constant 5 : i32
    %176 = arith.index_cast %c5_i32 : i32 to index
    %c0_51 = arith.constant 0 : index
    %c0_52 = arith.constant 0 : index
    %177 = vector.load %arg1[%176, %c0_51, %c0_52] : memref<8x2x512xf32, #tpu.memory_space<vmem>>, vector<1x2x512xf32>
    %178 = vector.shape_cast %177 : vector<1x2x512xf32> to vector<2x512xf32>
    %179 = arith.truncf %175 : vector<2x128xf32> to vector<2x128xbf16>
    %cst_53 = arith.constant dense<0.000000e+00> : vector<2x512xf32>
    %180 = tpu.matmul %179, %3, %cst_53 {dimension_numbers = #tpu.dot_dimension_numbers<[1], [0], [0], [1], [0, 0, 1, 1], [], []>} : vector<2x128xbf16>, vector<128x512xbf16>, vector<2x512xf32> -> vector<2x512xf32>
    %181 = arith.addf %178, %180 : vector<2x512xf32>
    %182 = vector.extract_strided_slice %181 {offsets = [0, 0], sizes = [2, 128], strides = [1, 1]} : vector<2x512xf32> to vector<2x128xf32>
    %cst_54 = arith.constant 0.000000e+00 : f32
    %183 = vector.broadcast %cst_54 : f32 to vector<2x128xf32>
    %184 = arith.subf %183, %182 : vector<2x128xf32>
    %185 = math.exp %184 : vector<2x128xf32>
    %cst_55 = arith.constant 1.000000e+00 : f32
    %186 = vector.broadcast %cst_55 : f32 to vector<2x128xf32>
    %187 = arith.addf %186, %185 : vector<2x128xf32>
    %188 = tpu.reciprocal %187 {approx = true} : vector<2x128xf32> -> vector<2x128xf32>
    %189 = vector.extract_strided_slice %181 {offsets = [0, 128], sizes = [2, 128], strides = [1, 1]} : vector<2x512xf32> to vector<2x128xf32>
    %cst_56 = arith.constant 0.000000e+00 : f32
    %190 = vector.broadcast %cst_56 : f32 to vector<2x128xf32>
    %191 = arith.subf %190, %189 : vector<2x128xf32>
    %192 = math.exp %191 : vector<2x128xf32>
    %cst_57 = arith.constant 1.000000e+00 : f32
    %193 = vector.broadcast %cst_57 : f32 to vector<2x128xf32>
    %194 = arith.addf %193, %192 : vector<2x128xf32>
    %195 = tpu.reciprocal %194 {approx = true} : vector<2x128xf32> -> vector<2x128xf32>
    %196 = vector.extract_strided_slice %181 {offsets = [0, 256], sizes = [2, 128], strides = [1, 1]} : vector<2x512xf32> to vector<2x128xf32>
    %197 = math.tanh %196 : vector<2x128xf32>
    %198 = vector.extract_strided_slice %181 {offsets = [0, 384], sizes = [2, 128], strides = [1, 1]} : vector<2x512xf32> to vector<2x128xf32>
    %cst_58 = arith.constant 0.000000e+00 : f32
    %199 = vector.broadcast %cst_58 : f32 to vector<2x128xf32>
    %200 = arith.subf %199, %198 : vector<2x128xf32>
    %201 = math.exp %200 : vector<2x128xf32>
    %cst_59 = arith.constant 1.000000e+00 : f32
    %202 = vector.broadcast %cst_59 : f32 to vector<2x128xf32>
    %203 = arith.addf %202, %201 : vector<2x128xf32>
    %204 = tpu.reciprocal %203 {approx = true} : vector<2x128xf32> -> vector<2x128xf32>
    %205 = arith.mulf %195, %173 : vector<2x128xf32>
    %206 = arith.mulf %188, %197 : vector<2x128xf32>
    %207 = arith.addf %205, %206 : vector<2x128xf32>
    %208 = math.tanh %207 : vector<2x128xf32>
    %209 = arith.mulf %204, %208 : vector<2x128xf32>
    %c6_i32 = arith.constant 6 : i32
    %210 = arith.index_cast %c6_i32 : i32 to index
    %c0_60 = arith.constant 0 : index
    %c0_61 = arith.constant 0 : index
    %211 = vector.load %arg1[%210, %c0_60, %c0_61] : memref<8x2x512xf32, #tpu.memory_space<vmem>>, vector<1x2x512xf32>
    %212 = vector.shape_cast %211 : vector<1x2x512xf32> to vector<2x512xf32>
    %213 = arith.truncf %209 : vector<2x128xf32> to vector<2x128xbf16>
    %cst_62 = arith.constant dense<0.000000e+00> : vector<2x512xf32>
    %214 = tpu.matmul %213, %3, %cst_62 {dimension_numbers = #tpu.dot_dimension_numbers<[1], [0], [0], [1], [0, 0, 1, 1], [], []>} : vector<2x128xbf16>, vector<128x512xbf16>, vector<2x512xf32> -> vector<2x512xf32>
    %215 = arith.addf %212, %214 : vector<2x512xf32>
    %216 = vector.extract_strided_slice %215 {offsets = [0, 0], sizes = [2, 128], strides = [1, 1]} : vector<2x512xf32> to vector<2x128xf32>
    %cst_63 = arith.constant 0.000000e+00 : f32
    %217 = vector.broadcast %cst_63 : f32 to vector<2x128xf32>
    %218 = arith.subf %217, %216 : vector<2x128xf32>
    %219 = math.exp %218 : vector<2x128xf32>
    %cst_64 = arith.constant 1.000000e+00 : f32
    %220 = vector.broadcast %cst_64 : f32 to vector<2x128xf32>
    %221 = arith.addf %220, %219 : vector<2x128xf32>
    %222 = tpu.reciprocal %221 {approx = true} : vector<2x128xf32> -> vector<2x128xf32>
    %223 = vector.extract_strided_slice %215 {offsets = [0, 128], sizes = [2, 128], strides = [1, 1]} : vector<2x512xf32> to vector<2x128xf32>
    %cst_65 = arith.constant 0.000000e+00 : f32
    %224 = vector.broadcast %cst_65 : f32 to vector<2x128xf32>
    %225 = arith.subf %224, %223 : vector<2x128xf32>
    %226 = math.exp %225 : vector<2x128xf32>
    %cst_66 = arith.constant 1.000000e+00 : f32
    %227 = vector.broadcast %cst_66 : f32 to vector<2x128xf32>
    %228 = arith.addf %227, %226 : vector<2x128xf32>
    %229 = tpu.reciprocal %228 {approx = true} : vector<2x128xf32> -> vector<2x128xf32>
    %230 = vector.extract_strided_slice %215 {offsets = [0, 256], sizes = [2, 128], strides = [1, 1]} : vector<2x512xf32> to vector<2x128xf32>
    %231 = math.tanh %230 : vector<2x128xf32>
    %232 = vector.extract_strided_slice %215 {offsets = [0, 384], sizes = [2, 128], strides = [1, 1]} : vector<2x512xf32> to vector<2x128xf32>
    %cst_67 = arith.constant 0.000000e+00 : f32
    %233 = vector.broadcast %cst_67 : f32 to vector<2x128xf32>
    %234 = arith.subf %233, %232 : vector<2x128xf32>
    %235 = math.exp %234 : vector<2x128xf32>
    %cst_68 = arith.constant 1.000000e+00 : f32
    %236 = vector.broadcast %cst_68 : f32 to vector<2x128xf32>
    %237 = arith.addf %236, %235 : vector<2x128xf32>
    %238 = tpu.reciprocal %237 {approx = true} : vector<2x128xf32> -> vector<2x128xf32>
    %239 = arith.mulf %229, %207 : vector<2x128xf32>
    %240 = arith.mulf %222, %231 : vector<2x128xf32>
    %241 = arith.addf %239, %240 : vector<2x128xf32>
    %242 = math.tanh %241 : vector<2x128xf32>
    %243 = arith.mulf %238, %242 : vector<2x128xf32>
    %c7_i32 = arith.constant 7 : i32
    %244 = arith.index_cast %c7_i32 : i32 to index
    %c0_69 = arith.constant 0 : index
    %c0_70 = arith.constant 0 : index
    %245 = vector.load %arg1[%244, %c0_69, %c0_70] : memref<8x2x512xf32, #tpu.memory_space<vmem>>, vector<1x2x512xf32>
    %246 = vector.shape_cast %245 : vector<1x2x512xf32> to vector<2x512xf32>
    %247 = arith.truncf %243 : vector<2x128xf32> to vector<2x128xbf16>
    %cst_71 = arith.constant dense<0.000000e+00> : vector<2x512xf32>
    %248 = tpu.matmul %247, %3, %cst_71 {dimension_numbers = #tpu.dot_dimension_numbers<[1], [0], [0], [1], [0, 0, 1, 1], [], []>} : vector<2x128xbf16>, vector<128x512xbf16>, vector<2x512xf32> -> vector<2x512xf32>
    %249 = arith.addf %246, %248 : vector<2x512xf32>
    %250 = vector.extract_strided_slice %249 {offsets = [0, 0], sizes = [2, 128], strides = [1, 1]} : vector<2x512xf32> to vector<2x128xf32>
    %cst_72 = arith.constant 0.000000e+00 : f32
    %251 = vector.broadcast %cst_72 : f32 to vector<2x128xf32>
    %252 = arith.subf %251, %250 : vector<2x128xf32>
    %253 = math.exp %252 : vector<2x128xf32>
    %cst_73 = arith.constant 1.000000e+00 : f32
    %254 = vector.broadcast %cst_73 : f32 to vector<2x128xf32>
    %255 = arith.addf %254, %253 : vector<2x128xf32>
    %256 = tpu.reciprocal %255 {approx = true} : vector<2x128xf32> -> vector<2x128xf32>
    %257 = vector.extract_strided_slice %249 {offsets = [0, 128], sizes = [2, 128], strides = [1, 1]} : vector<2x512xf32> to vector<2x128xf32>
    %cst_74 = arith.constant 0.000000e+00 : f32
    %258 = vector.broadcast %cst_74 : f32 to vector<2x128xf32>
    %259 = arith.subf %258, %257 : vector<2x128xf32>
    %260 = math.exp %259 : vector<2x128xf32>
    %cst_75 = arith.constant 1.000000e+00 : f32
    %261 = vector.broadcast %cst_75 : f32 to vector<2x128xf32>
    %262 = arith.addf %261, %260 : vector<2x128xf32>
    %263 = tpu.reciprocal %262 {approx = true} : vector<2x128xf32> -> vector<2x128xf32>
    %264 = vector.extract_strided_slice %249 {offsets = [0, 256], sizes = [2, 128], strides = [1, 1]} : vector<2x512xf32> to vector<2x128xf32>
    %265 = math.tanh %264 : vector<2x128xf32>
    %266 = vector.extract_strided_slice %249 {offsets = [0, 384], sizes = [2, 128], strides = [1, 1]} : vector<2x512xf32> to vector<2x128xf32>
    %cst_76 = arith.constant 0.000000e+00 : f32
    %267 = vector.broadcast %cst_76 : f32 to vector<2x128xf32>
    %268 = arith.subf %267, %266 : vector<2x128xf32>
    %269 = math.exp %268 : vector<2x128xf32>
    %cst_77 = arith.constant 1.000000e+00 : f32
    %270 = vector.broadcast %cst_77 : f32 to vector<2x128xf32>
    %271 = arith.addf %270, %269 : vector<2x128xf32>
    %272 = tpu.reciprocal %271 {approx = true} : vector<2x128xf32> -> vector<2x128xf32>
    %273 = arith.mulf %263, %241 : vector<2x128xf32>
    %274 = arith.mulf %256, %265 : vector<2x128xf32>
    %275 = arith.addf %273, %274 : vector<2x128xf32>
    %276 = math.tanh %275 : vector<2x128xf32>
    %277 = arith.mulf %272, %276 : vector<2x128xf32>
    %c8_i32 = arith.constant 8 : i32
    %c0_78 = arith.constant 0 : index
    %c0_79 = arith.constant 0 : index
    %278 = vector.load %arg7[%c0_78, %c0_79] : memref<2x128xf32, #tpu.memory_space<vmem>>, vector<2x128xf32>
    tpu.vector_store %arg7[%c0_78, %c0_79], %277 {strides = array<i32>} : memref<2x128xf32, #tpu.memory_space<vmem>>, vector<2x128xf32>,
    %c0_80 = arith.constant 0 : index
    %c0_81 = arith.constant 0 : index
    %279 = vector.load %arg8[%c0_80, %c0_81] : memref<2x128xf32, #tpu.memory_space<vmem>>, vector<2x128xf32>
    tpu.vector_store %arg8[%c0_80, %c0_81], %275 {strides = array<i32>} : memref<2x128xf32, #tpu.memory_space<vmem>>, vector<2x128xf32>,
    %c0_i32_82 = arith.constant 0 : i32
    %280 = arith.cmpi eq, %arg0, %c0_i32_82 : i32
    %281 = arith.extui %280 : i1 to i32
    %c0_i32_83 = arith.constant 0 : i32
    %282 = arith.cmpi ne, %281, %c0_i32_83 : i32
    scf.if %282 {
      %c0_84 = arith.constant 0 : index
      %c0_85 = arith.constant 0 : index
      %283 = vector.load %arg3[%c0_84, %c0_85] : memref<2x128xf32, #tpu.memory_space<vmem>>, vector<2x128xf32>
      tpu.vector_store %arg3[%c0_84, %c0_85], %277 {strides = array<i32>} : memref<2x128xf32, #tpu.memory_space<vmem>>, vector<2x128xf32>,
      %c0_86 = arith.constant 0 : index
      %c0_87 = arith.constant 0 : index
      %284 = vector.load %arg4[%c0_86, %c0_87] : memref<2x128xf32, #tpu.memory_space<vmem>>, vector<2x128xf32>
      tpu.vector_store %arg4[%c0_86, %c0_87], %275 {strides = array<i32>} : memref<2x128xf32, #tpu.memory_space<vmem>>, vector<2x128xf32>,
    } else {
    }
    return
  }
  func.func @transform_0(%arg0: i32) -> (i32, i32, i32) {
    %c0_i32 = arith.constant 0 : i32
    %c0_i32_0 = arith.constant 0 : i32
    %c0_i32_1 = arith.constant 0 : i32
    return %arg0, %c0_i32, %c0_i32_0 : i32, i32, i32
  }
  func.func @transform_2(%arg0: i32) -> (i32, i32) {
    %c0_i32 = arith.constant 0 : i32
    %c0_i32_0 = arith.constant 0 : i32
    %c0_i32_1 = arith.constant 0 : i32
    return %c0_i32, %c0_i32_0 : i32, i32
  }
  func.func @transform_3(%arg0: i32) -> (i32, i32) {
    %c0_i32 = arith.constant 0 : i32
    %c0_i32_0 = arith.constant 0 : i32
    %c0_i32_1 = arith.constant 0 : i32
    return %c0_i32, %c0_i32_0 : i32, i32
  }
}

</mosaic_0001>

<llo_original>
// kernel: lstm_pallas.1
$region0: #{lstm_pallas.1}
  #allocation0 [shape = 'u32[]', space=smem, size = 0x4, offset = 0x4, fixed_abs, tag = 'smem constant byte address 0x4 - core index']
  #allocation1 [shape = 'u32[144,128]{1,0:T(1,128)}', space=vmem, size = 0x12000, scoped, tag = 'internal scratch']
  #allocation2 [shape = 'bf16[128,512]{1,0:T(16,128)(2,1)}', space=vmem, size = 0x20000, scoped, tag = 'scratch operand']
  #allocation3 [shape = 's32[1]{0}', space=sflag, size = 0x4, scoped, tag = 'scratch operand']
  #allocation4 [shape = 'f32[2,128]{1,0:T(2,128)}', space=vmem, size = 0x400, scoped, tag = 'scratch operand']
  #allocation5 [shape = 'f32[2,128]{1,0:T(2,128)}', space=vmem, size = 0x400, scoped, tag = 'scratch operand']
  #allocation10 [shape = 's32[]', space=sflag, size = 0x4, offset = 0, fixed_abs, tag = 'sflag constant byte address 0x0 - dummy sync flag']
  %s0 = inlined_call_operand.vmem [shape: f32[8,2,512], index: 0, kind: input, shape index: {}]
  %s1 = inlined_call_operand.vmem [shape: bf16[128,512], index: 1, kind: input, shape index: {}]
  %s2 = inlined_call_operand.hbm [shape: f32[2,128], index: 2, kind: output, shape index: {0}]
  %s3 = inlined_call_operand.hbm [shape: f32[2,128], index: 3, kind: output, shape index: {1}]
  %4 = xla_tuple %s2, %s3
  %s5 = sld [smem:[#allocation0]]
  $region67: #{lstm_pallas.1} parent=0
    _
  %s7 = ssub.s32 1, %s5
  %s8 = scalar_select 0, %s7, %s5
  $region1: #{lstm_pallas.1} parent=0
    #allocation6 [shape = 'u8[1024]{0}', space=vmem, size = 0x400, scoped, tag = 'output window, operand 0, single buffered']
    #allocation7 [shape = 's32[1]{0}', space=sflag, size = 0x4, scoped, tag = 'scoped memory for lstm_pallas.1']
    #allocation8 [shape = 'u8[1024]{0}', space=vmem, size = 0x400, scoped, tag = 'output window, operand 1, single buffered']
    #allocation9 [shape = 's32[1]{0}', space=sflag, size = 0x4, scoped, tag = 'scoped memory for lstm_pallas.1']
    %9 = vsyncpa [#allocation7], 0
    %10 = vsyncpa [#allocation9], 0
    // Predicated region
    $region2: #{lstm_pallas.1} parent=1 // pred_check
      _
    $region3: #{lstm_pallas.1} parent=1 // pred_check_branch
      %12 = sbr.rel (0) target = $region5
    $region4: #{lstm_pallas.1} parent=1 // pred_region
      _
    $region5: #{lstm_pallas.1} parent=1 // pred_fallthru
      _
    %p14 = scmp.eq.s32.totalorder 0, 0
    // Predicated region
    $region6: #{lstm_pallas.1} parent=1 // pred_check
      %p15 = pneg %p14
    $region7: #{lstm_pallas.1} parent=1 // pred_check_branch
      %17 = sbr.rel (%p15) target = $region9
    $region8: #{lstm_pallas.1} parent=1 // pred_region
      %p19 = scmp.lt.u32.totalorder 4, 8
      %p20 = pneg %p19
      // Predicated region
      $region10: #{lstm_pallas.1} parent=8 // pred_check
        _
      $region11: #{lstm_pallas.1} parent=8 // pred_check_branch
        %22 = sbr.rel (%p19) target = $region13
      $region12: #{lstm_pallas.1} parent=8 // pred_region
        %s163 = sand.u32 4, 7
        %p164 = scmp.eq.s32.totalorder %s163, 0
        %p165 = pneg %p164
        // Predicated region
        $region25: #{lstm_pallas.1} parent=12 // pred_check
          _
        $region26: #{lstm_pallas.1} parent=12 // pred_check_branch
          %167 = sbr.rel (%p164) target = $region28
        $region27: #{lstm_pallas.1} parent=12 // pred_region
          %s168 = sand.u32 4, 7
          %s169 = ssub.s32 4, %s168
          %s170 = scalar_lea.vmem %s1, %s169
          %s171 = ssub.s32 4, %s168
          %s172 = scalar_lea.vmem [#allocation2], %s171
          loop: start=0, step=1, limit=1
          $region29: #{lstm_pallas.1} parent=27 // loop_pre_header
            _
          $region30: #{lstm_pallas.1} parent=27 // loop_header
            %s174 = sphi 0, %s178
            %p175 = scmp.ge.s32.totalorder %s174, 1
            %s179 = sphi %s1, %s1
            %s180 = sphi [#allocation2], [#allocation2]
          $region31: #{lstm_pallas.1} parent=27 // loop_header_branch
            %177 = sbr.rel (%p175) target = $region35
          $region32: #{lstm_pallas.1} parent=27 // loop_body
            _
          $region33: #{lstm_pallas.1} parent=27 // loop_footer
            %s178 = sadd.s32 1, %s174
          $region34: #{lstm_pallas.1} parent=27 // loop_footer_branch
            %173 = sbr.rel target = $region30
          $region35: #{lstm_pallas.1} parent=27 // loop_exit
            _
          %s181 = sshllo.u32 0, %s168
          loop: start=0, step=1, limit=1
          $region36: #{lstm_pallas.1} parent=27 // loop_pre_header
            _
          $region37: #{lstm_pallas.1} parent=27 // loop_header
            %s183 = sphi 0, %s187
            %p184 = scmp.ge.s32.totalorder %s183, 1
            %s188 = sphi %s170, %s170
            %s189 = sphi %s172, %s172
          $region38: #{lstm_pallas.1} parent=27 // loop_header_branch
            %186 = sbr.rel (%p184) target = $region42
          $region39: #{lstm_pallas.1} parent=27 // loop_body
            %v190 = vld [vmem:[%s188] sm:%s181]
            %191 = vst [vmem:[%s189] sm:%s181] %v190
            %v192 = vld [vmem:[%s188 + $0x10] sm:%s181]
            %193 = vst [vmem:[%s189 + $0x4] sm:%s181] %v192
            %v194 = vld [vmem:[%s188 + $0x4] sm:%s181]
            %195 = vst [vmem:[%s189 + $0x8] sm:%s181] %v194
            %v196 = vld [vmem:[%s188 + $0x14] sm:%s181]
            %197 = vst [vmem:[%s189 + $0xc] sm:%s181] %v196
            %v198 = vld [vmem:[%s188 + $0x8] sm:%s181]
            %199 = vst [vmem:[%s189 + $0x10] sm:%s181] %v198
            %v200 = vld [vmem:[%s188 + $0x18] sm:%s181]
            %201 = vst [vmem:[%s189 + $0x14] sm:%s181] %v200
            %v202 = vld [vmem:[%s188 + $0xc] sm:%s181]
            %203 = vst [vmem:[%s189 + $0x18] sm:%s181] %v202
            %v204 = vld [vmem:[%s188 + $0x1c] sm:%s181]
            %205 = vst [vmem:[%s189 + $0x1c] sm:%s181] %v204
            %v206 = vld [vmem:[%s188 + $0x20] sm:%s181]
            %207 = vst [vmem:[%s189 + $0x20] sm:%s181] %v206
            %v208 = vld [vmem:[%s188 + $0x30] sm:%s181]
            %209 = vst [vmem:[%s189 + $0x24] sm:%s181] %v208
            %v210 = vld [vmem:[%s188 + $0x24] sm:%s181]
            %211 = vst [vmem:[%s189 + $0x28] sm:%s181] %v210
            %v212 = vld [vmem:[%s188 + $0x34] sm:%s181]
            %213 = vst [vmem:[%s189 + $0x2c] sm:%s181] %v212
            %v214 = vld [vmem:[%s188 + $0x28] sm:%s181]
            %215 = vst [vmem:[%s189 + $0x30] sm:%s181] %v214
            %v216 = vld [vmem:[%s188 + $0x38] sm:%s181]
            %217 = vst [vmem:[%s189 + $0x34] sm:%s181] %v216
            %v218 = vld [vmem:[%s188 + $0x2c] sm:%s181]
            %219 = vst [vmem:[%s189 + $0x38] sm:%s181] %v218
            %v220 = vld [vmem:[%s188 + $0x3c] sm:%s181]
            %221 = vst [vmem:[%s189 + $0x3c] sm:%s181] %v220
            %v222 = vld [vmem:[%s188 + $0x40] sm:%s181]
            %223 = vst [vmem:[%s189 + $0x40] sm:%s181] %v222
            %v224 = vld [vmem:[%s188 + $0x50] sm:%s181]
            %225 = vst [vmem:[%s189 + $0x44] sm:%s181] %v224
            %v226 = vld [vmem:[%s188 + $0x44] sm:%s181]
            %227 = vst [vmem:[%s189 + $0x48] sm:%s181] %v226
            %v228 = vld [vmem:[%s188 + $0x54] sm:%s181]
            %229 = vst [vmem:[%s189 + $0x4c] sm:%s181] %v228
            %v230 = vld [vmem:[%s188 + $0x48] sm:%s181]
            %231 = vst [vmem:[%s189 + $0x50] sm:%s181] %v230
            %v232 = vld [vmem:[%s188 + $0x58] sm:%s181]
            %233 = vst [vmem:[%s189 + $0x54] sm:%s181] %v232
            %v234 = vld [vmem:[%s188 + $0x4c] sm:%s181]
            %235 = vst [vmem:[%s189 + $0x58] sm:%s181] %v234
            %v236 = vld [vmem:[%s188 + $0x5c] sm:%s181]
            %237 = vst [vmem:[%s189 + $0x5c] sm:%s181] %v236
            %v238 = vld [vmem:[%s188 + $0x60] sm:%s181]
            %239 = vst [vmem:[%s189 + $0x60] sm:%s181] %v238
            %v240 = vld [vmem:[%s188 + $0x70] sm:%s181]
            %241 = vst [vmem:[%s189 + $0x64] sm:%s181] %v240
            %v242 = vld [vmem:[%s188 + $0x64] sm:%s181]
            %243 = vst [vmem:[%s189 + $0x68] sm:%s181] %v242
            %v244 = vld [vmem:[%s188 + $0x74] sm:%s181]
            %245 = vst [vmem:[%s189 + $0x6c] sm:%s181] %v244
            %v246 = vld [vmem:[%s188 + $0x68] sm:%s181]
            %247 = vst [vmem:[%s189 + $0x70] sm:%s181] %v246
            %v248 = vld [vmem:[%s188 + $0x78] sm:%s181]
            %249 = vst [vmem:[%s189 + $0x74] sm:%s181] %v248
            %v250 = vld [vmem:[%s188 + $0x6c] sm:%s181]
            %251 = vst [vmem:[%s189 + $0x78] sm:%s181] %v250
            %v252 = vld [vmem:[%s188 + $0x7c] sm:%s181]
            %253 = vst [vmem:[%s189 + $0x7c] sm:%s181] %v252
            %v254 = vld [vmem:[%s188 + $0x80] sm:%s181]
            %255 = vst [vmem:[%s189 + $0x80] sm:%s181] %v254
            %v256 = vld [vmem:[%s188 + $0x90] sm:%s181]
            %257 = vst [vmem:[%s189 + $0x84] sm:%s181] %v256
            %v258 = vld [vmem:[%s188 + $0x84] sm:%s181]
            %259 = vst [vmem:[%s189 + $0x88] sm:%s181] %v258
            %v260 = vld [vmem:[%s188 + $0x94] sm:%s181]
            %261 = vst [vmem:[%s189 + $0x8c] sm:%s181] %v260
            %v262 = vld [vmem:[%s188 + $0x88] sm:%s181]
            %263 = vst [vmem:[%s189 + $0x90] sm:%s181] %v262
            %v264 = vld [vmem:[%s188 + $0x98] sm:%s181]
            %265 = vst [vmem:[%s189 + $0x94] sm:%s181] %v264
            %v266 = vld [vmem:[%s188 + $0x8c] sm:%s181]
            %267 = vst [vmem:[%s189 + $0x98] sm:%s181] %v266
            %v268 = vld [vmem:[%s188 + $0x9c] sm:%s181]
            %269 = vst [vmem:[%s189 + $0x9c] sm:%s181] %v268
            %v270 = vld [vmem:[%s188 + $0xa0] sm:%s181]
            %271 = vst [vmem:[%s189 + $0xa0] sm:%s181] %v270
            %v272 = vld [vmem:[%s188 + $0xb0] sm:%s181]
            %273 = vst [vmem:[%s189 + $0xa4] sm:%s181] %v272
            %v274 = vld [vmem:[%s188 + $0xa4] sm:%s181]
            %275 = vst [vmem:[%s189 + $0xa8] sm:%s181] %v274
            %v276 = vld [vmem:[%s188 + $0xb4] sm:%s181]
            %277 = vst [vmem:[%s189 + $0xac] sm:%s181] %v276
            %v278 = vld [vmem:[%s188 + $0xa8] sm:%s181]
            %279 = vst [vmem:[%s189 + $0xb0] sm:%s181] %v278
            %v280 = vld [vmem:[%s188 + $0xb8] sm:%s181]
            %281 = vst [vmem:[%s189 + $0xb4] sm:%s181] %v280
            %v282 = vld [vmem:[%s188 + $0xac] sm:%s181]
            %283 = vst [vmem:[%s189 + $0xb8] sm:%s181] %v282
            %v284 = vld [vmem:[%s188 + $0xbc] sm:%s181]
            %285 = vst [vmem:[%s189 + $0xbc] sm:%s181] %v284
            %v286 = vld [vmem:[%s188 + $0xc0] sm:%s181]
            %287 = vst [vmem:[%s189 + $0xc0] sm:%s181] %v286
            %v288 = vld [vmem:[%s188 + $0xd0] sm:%s181]
            %289 = vst [vmem:[%s189 + $0xc4] sm:%s181] %v288
            %v290 = vld [vmem:[%s188 + $0xc4] sm:%s181]
            %291 = vst [vmem:[%s189 + $0xc8] sm:%s181] %v290
            %v292 = vld [vmem:[%s188 + $0xd4] sm:%s181]
            %293 = vst [vmem:[%s189 + $0xcc] sm:%s181] %v292
            %v294 = vld [vmem:[%s188 + $0xc8] sm:%s181]
            %295 = vst [vmem:[%s189 + $0xd0] sm:%s181] %v294
            %v296 = vld [vmem:[%s188 + $0xd8] sm:%s181]
            %297 = vst [vmem:[%s189 + $0xd4] sm:%s181] %v296
            %v298 = vld [vmem:[%s188 + $0xcc] sm:%s181]
            %299 = vst [vmem:[%s189 + $0xd8] sm:%s181] %v298
            %v300 = vld [vmem:[%s188 + $0xdc] sm:%s181]
            %301 = vst [vmem:[%s189 + $0xdc] sm:%s181] %v300
            %v302 = vld [vmem:[%s188 + $0xe0] sm:%s181]
            %303 = vst [vmem:[%s189 + $0xe0] sm:%s181] %v302
            %v304 = vld [vmem:[%s188 + $0xf0] sm:%s181]
            %305 = vst [vmem:[%s189 + $0xe4] sm:%s181] %v304
            %v306 = vld [vmem:[%s188 + $0xe4] sm:%s181]
            %307 = vst [vmem:[%s189 + $0xe8] sm:%s181] %v306
            %v308 = vld [vmem:[%s188 + $0xf4] sm:%s181]
            %309 = vst [vmem:[%s189 + $0xec] sm:%s181] %v308
            %v310 = vld [vmem:[%s188 + $0xe8] sm:%s181]
            %311 = vst [vmem:[%s189 + $0xf0] sm:%s181] %v310
            %v312 = vld [vmem:[%s188 + $0xf8] sm:%s181]
            %313 = vst [vmem:[%s189 + $0xf4] sm:%s181] %v312
            %v314 = vld [vmem:[%s188 + $0xec] sm:%s181]
            %315 = vst [vmem:[%s189 + $0xf8] sm:%s181] %v314
            %v316 = vld [vmem:[%s188 + $0xfc] sm:%s181]
            %317 = vst [vmem:[%s189 + $0xfc] sm:%s181] %v316
          $region40: #{lstm_pallas.1} parent=27 // loop_footer
            %s187 = sadd.s32 1, %s183
          $region41: #{lstm_pallas.1} parent=27 // loop_footer_branch
            %182 = sbr.rel target = $region37
          $region42: #{lstm_pallas.1} parent=27 // loop_exit
            _
        $region28: #{lstm_pallas.1} parent=12 // pred_fallthru
          _
      $region13: #{lstm_pallas.1} parent=8 // pred_fallthru
        _
      // Predicated region
      $region14: #{lstm_pallas.1} parent=8 // pred_check
        %p23 = pneg %p19
      $region15: #{lstm_pallas.1} parent=8 // pred_check_branch
        %25 = sbr.rel (%p23) target = $region17
      $region16: #{lstm_pallas.1} parent=8 // pred_region
        %s26 = sshllo.u32 0, 4
        loop: start=0, step=1, limit=1
        $region18: #{lstm_pallas.1} parent=16 // loop_pre_header
          _
        $region19: #{lstm_pallas.1} parent=16 // loop_header
          %s28 = sphi 0, %s32
          %p29 = scmp.ge.s32.totalorder %s28, 1
          %s33 = sphi %s1, %s1
          %s34 = sphi [#allocation2], [#allocation2]
        $region20: #{lstm_pallas.1} parent=16 // loop_header_branch
          %31 = sbr.rel (%p29) target = $region24
        $region21: #{lstm_pallas.1} parent=16 // loop_body
          %v35 = vld [vmem:[%s33] sm:%s26]
          %36 = vst [vmem:[%s34] sm:%s26] %v35
          %v37 = vld [vmem:[%s33 + $0x10] sm:%s26]
          %38 = vst [vmem:[%s34 + $0x4] sm:%s26] %v37
          %v39 = vld [vmem:[%s33 + $0x4] sm:%s26]
          %40 = vst [vmem:[%s34 + $0x8] sm:%s26] %v39
          %v41 = vld [vmem:[%s33 + $0x14] sm:%s26]
          %42 = vst [vmem:[%s34 + $0xc] sm:%s26] %v41
          %v43 = vld [vmem:[%s33 + $0x8] sm:%s26]
          %44 = vst [vmem:[%s34 + $0x10] sm:%s26] %v43
          %v45 = vld [vmem:[%s33 + $0x18] sm:%s26]
          %46 = vst [vmem:[%s34 + $0x14] sm:%s26] %v45
          %v47 = vld [vmem:[%s33 + $0xc] sm:%s26]
          %48 = vst [vmem:[%s34 + $0x18] sm:%s26] %v47
          %v49 = vld [vmem:[%s33 + $0x1c] sm:%s26]
          %50 = vst [vmem:[%s34 + $0x1c] sm:%s26] %v49
          %v51 = vld [vmem:[%s33 + $0x20] sm:%s26]
          %52 = vst [vmem:[%s34 + $0x20] sm:%s26] %v51
          %v53 = vld [vmem:[%s33 + $0x30] sm:%s26]
          %54 = vst [vmem:[%s34 + $0x24] sm:%s26] %v53
          %v55 = vld [vmem:[%s33 + $0x24] sm:%s26]
          %56 = vst [vmem:[%s34 + $0x28] sm:%s26] %v55
          %v57 = vld [vmem:[%s33 + $0x34] sm:%s26]
          %58 = vst [vmem:[%s34 + $0x2c] sm:%s26] %v57
          %v59 = vld [vmem:[%s33 + $0x28] sm:%s26]
          %60 = vst [vmem:[%s34 + $0x30] sm:%s26] %v59
          %v61 = vld [vmem:[%s33 + $0x38] sm:%s26]
          %62 = vst [vmem:[%s34 + $0x34] sm:%s26] %v61
          %v63 = vld [vmem:[%s33 + $0x2c] sm:%s26]
          %64 = vst [vmem:[%s34 + $0x38] sm:%s26] %v63
          %v65 = vld [vmem:[%s33 + $0x3c] sm:%s26]
          %66 = vst [vmem:[%s34 + $0x3c] sm:%s26] %v65
          %v67 = vld [vmem:[%s33 + $0x40] sm:%s26]
          %68 = vst [vmem:[%s34 + $0x40] sm:%s26] %v67
          %v69 = vld [vmem:[%s33 + $0x50] sm:%s26]
          %70 = vst [vmem:[%s34 + $0x44] sm:%s26] %v69
          %v71 = vld [vmem:[%s33 + $0x44] sm:%s26]
          %72 = vst [vmem:[%s34 + $0x48] sm:%s26] %v71
          %v73 = vld [vmem:[%s33 + $0x54] sm:%s26]
          %74 = vst [vmem:[%s34 + $0x4c] sm:%s26] %v73
          %v75 = vld [vmem:[%s33 + $0x48] sm:%s26]
          %76 = vst [vmem:[%s34 + $0x50] sm:%s26] %v75
          %v77 = vld [vmem:[%s33 + $0x58] sm:%s26]
          %78 = vst [vmem:[%s34 + $0x54] sm:%s26] %v77
          %v79 = vld [vmem:[%s33 + $0x4c] sm:%s26]
          %80 = vst [vmem:[%s34 + $0x58] sm:%s26] %v79
          %v81 = vld [vmem:[%s33 + $0x5c] sm:%s26]
          %82 = vst [vmem:[%s34 + $0x5c] sm:%s26] %v81
          %v83 = vld [vmem:[%s33 + $0x60] sm:%s26]
          %84 = vst [vmem:[%s34 + $0x60] sm:%s26] %v83
          %v85 = vld [vmem:[%s33 + $0x70] sm:%s26]
          %86 = vst [vmem:[%s34 + $0x64] sm:%s26] %v85
          %v87 = vld [vmem:[%s33 + $0x64] sm:%s26]
          %88 = vst [vmem:[%s34 + $0x68] sm:%s26] %v87
          %v89 = vld [vmem:[%s33 + $0x74] sm:%s26]
          %90 = vst [vmem:[%s34 + $0x6c] sm:%s26] %v89
          %v91 = vld [vmem:[%s33 + $0x68] sm:%s26]
          %92 = vst [vmem:[%s34 + $0x70] sm:%s26] %v91
          %v93 = vld [vmem:[%s33 + $0x78] sm:%s26]
          %94 = vst [vmem:[%s34 + $0x74] sm:%s26] %v93
          %v95 = vld [vmem:[%s33 + $0x6c] sm:%s26]
          %96 = vst [vmem:[%s34 + $0x78] sm:%s26] %v95
          %v97 = vld [vmem:[%s33 + $0x7c] sm:%s26]
          %98 = vst [vmem:[%s34 + $0x7c] sm:%s26] %v97
          %v99 = vld [vmem:[%s33 + $0x80] sm:%s26]
          %100 = vst [vmem:[%s34 + $0x80] sm:%s26] %v99
          %v101 = vld [vmem:[%s33 + $0x90] sm:%s26]
          %102 = vst [vmem:[%s34 + $0x84] sm:%s26] %v101
          %v103 = vld [vmem:[%s33 + $0x84] sm:%s26]
          %104 = vst [vmem:[%s34 + $0x88] sm:%s26] %v103
          %v105 = vld [vmem:[%s33 + $0x94] sm:%s26]
          %106 = vst [vmem:[%s34 + $0x8c] sm:%s26] %v105
          %v107 = vld [vmem:[%s33 + $0x88] sm:%s26]
          %108 = vst [vmem:[%s34 + $0x90] sm:%s26] %v107
          %v109 = vld [vmem:[%s33 + $0x98] sm:%s26]
          %110 = vst [vmem:[%s34 + $0x94] sm:%s26] %v109
          %v111 = vld [vmem:[%s33 + $0x8c] sm:%s26]
          %112 = vst [vmem:[%s34 + $0x98] sm:%s26] %v111
          %v113 = vld [vmem:[%s33 + $0x9c] sm:%s26]
          %114 = vst [vmem:[%s34 + $0x9c] sm:%s26] %v113
          %v115 = vld [vmem:[%s33 + $0xa0] sm:%s26]
          %116 = vst [vmem:[%s34 + $0xa0] sm:%s26] %v115
          %v117 = vld [vmem:[%s33 + $0xb0] sm:%s26]
          %118 = vst [vmem:[%s34 + $0xa4] sm:%s26] %v117
          %v119 = vld [vmem:[%s33 + $0xa4] sm:%s26]
          %120 = vst [vmem:[%s34 + $0xa8] sm:%s26] %v119
          %v121 = vld [vmem:[%s33 + $0xb4] sm:%s26]
          %122 = vst [vmem:[%s34 + $0xac] sm:%s26] %v121
          %v123 = vld [vmem:[%s33 + $0xa8] sm:%s26]
          %124 = vst [vmem:[%s34 + $0xb0] sm:%s26] %v123
          %v125 = vld [vmem:[%s33 + $0xb8] sm:%s26]
          %126 = vst [vmem:[%s34 + $0xb4] sm:%s26] %v125
          %v127 = vld [vmem:[%s33 + $0xac] sm:%s26]
          %128 = vst [vmem:[%s34 + $0xb8] sm:%s26] %v127
          %v129 = vld [vmem:[%s33 + $0xbc] sm:%s26]
          %130 = vst [vmem:[%s34 + $0xbc] sm:%s26] %v129
          %v131 = vld [vmem:[%s33 + $0xc0] sm:%s26]
          %132 = vst [vmem:[%s34 + $0xc0] sm:%s26] %v131
          %v133 = vld [vmem:[%s33 + $0xd0] sm:%s26]
          %134 = vst [vmem:[%s34 + $0xc4] sm:%s26] %v133
          %v135 = vld [vmem:[%s33 + $0xc4] sm:%s26]
          %136 = vst [vmem:[%s34 + $0xc8] sm:%s26] %v135
          %v137 = vld [vmem:[%s33 + $0xd4] sm:%s26]
          %138 = vst [vmem:[%s34 + $0xcc] sm:%s26] %v137
          %v139 = vld [vmem:[%s33 + $0xc8] sm:%s26]
          %140 = vst [vmem:[%s34 + $0xd0] sm:%s26] %v139
          %v141 = vld [vmem:[%s33 + $0xd8] sm:%s26]
          %142 = vst [vmem:[%s34 + $0xd4] sm:%s26] %v141
          %v143 = vld [vmem:[%s33 + $0xcc] sm:%s26]
          %144 = vst [vmem:[%s34 + $0xd8] sm:%s26] %v143
          %v145 = vld [vmem:[%s33 + $0xdc] sm:%s26]
          %146 = vst [vmem:[%s34 + $0xdc] sm:%s26] %v145
          %v147 = vld [vmem:[%s33 + $0xe0] sm:%s26]
          %148 = vst [vmem:[%s34 + $0xe0] sm:%s26] %v147
          %v149 = vld [vmem:[%s33 + $0xf0] sm:%s26]
          %150 = vst [vmem:[%s34 + $0xe4] sm:%s26] %v149
          %v151 = vld [vmem:[%s33 + $0xe4] sm:%s26]
          %152 = vst [vmem:[%s34 + $0xe8] sm:%s26] %v151
          %v153 = vld [vmem:[%s33 + $0xf4] sm:%s26]
          %154 = vst [vmem:[%s34 + $0xec] sm:%s26] %v153
          %v155 = vld [vmem:[%s33 + $0xe8] sm:%s26]
          %156 = vst [vmem:[%s34 + $0xf0] sm:%s26] %v155
          %v157 = vld [vmem:[%s33 + $0xf8] sm:%s26]
          %158 = vst [vmem:[%s34 + $0xf4] sm:%s26] %v157
          %v159 = vld [vmem:[%s33 + $0xec] sm:%s26]
          %160 = vst [vmem:[%s34 + $0xf8] sm:%s26] %v159
          %v161 = vld [vmem:[%s33 + $0xfc] sm:%s26]
          %162 = vst [vmem:[%s34 + $0xfc] sm:%s26] %v161
        $region22: #{lstm_pallas.1} parent=16 // loop_footer
          %s32 = sadd.s32 1, %s28
        $region23: #{lstm_pallas.1} parent=16 // loop_footer_branch
          %27 = sbr.rel target = $region19
        $region24: #{lstm_pallas.1} parent=16 // loop_exit
          _
      $region17: #{lstm_pallas.1} parent=8 // pred_fallthru
        _
      // Predicated region
      $region43: #{lstm_pallas.1} parent=8 // pred_check
        _
      $region44: #{lstm_pallas.1} parent=8 // pred_check_branch
        %320 = sbr.rel (0) target = $region46
      $region45: #{lstm_pallas.1} parent=8 // pred_region
        %321 = vsyncadd [#allocation3], 4096
      $region46: #{lstm_pallas.1} parent=8 // pred_fallthru
        _
      %s322 = smul.u32 4, 16
      %s323 = smul.u32 %s322, 4
      %s324 = sshll.u32 %s323, 4
      %325 = dma.done [#allocation3], %s324
      %326 = vst [vmem:[#allocation4] sm:$0x3] 0.0
      %327 = vst [vmem:[#allocation5] sm:$0x3] 0.0
    $region9: #{lstm_pallas.1} parent=1 // pred_fallthru
      _
    %v328 = vld [vmem:[#allocation2] sm:$0xff]
    %v329 = vld [vmem:[#allocation2 + $0x8] sm:$0xff]
    %v330 = vld [vmem:[#allocation2 + $0x10] sm:$0xff]
    %v331 = vld [vmem:[#allocation2 + $0x18] sm:$0xff]
    %v332 = vld [vmem:[#allocation2 + $0x20] sm:$0xff]
    %v333 = vld [vmem:[#allocation2 + $0x28] sm:$0xff]
    %v334 = vld [vmem:[#allocation2 + $0x30] sm:$0xff]
    %v335 = vld [vmem:[#allocation2 + $0x38] sm:$0xff]
    %v336 = vld [vmem:[#allocation2 + $0x40] sm:$0xff]
    %v337 = vld [vmem:[#allocation2 + $0x48] sm:$0xff]
    %v338 = vld [vmem:[#allocation2 + $0x50] sm:$0xff]
    %v339 = vld [vmem:[#allocation2 + $0x58] sm:$0xff]
    %v340 = vld [vmem:[#allocation2 + $0x60] sm:$0xff]
    %v341 = vld [vmem:[#allocation2 + $0x68] sm:$0xff]
    %v342 = vld [vmem:[#allocation2 + $0x70] sm:$0xff]
    %v343 = vld [vmem:[#allocation2 + $0x78] sm:$0xff]
    %v344 = vld [vmem:[#allocation2 + $0x80] sm:$0xff]
    %v345 = vld [vmem:[#allocation2 + $0x88] sm:$0xff]
    %v346 = vld [vmem:[#allocation2 + $0x90] sm:$0xff]
    %v347 = vld [vmem:[#allocation2 + $0x98] sm:$0xff]
    %v348 = vld [vmem:[#allocation2 + $0xa0] sm:$0xff]
    %v349 = vld [vmem:[#allocation2 + $0xa8] sm:$0xff]
    %v350 = vld [vmem:[#allocation2 + $0xb0] sm:$0xff]
    %v351 = vld [vmem:[#allocation2 + $0xb8] sm:$0xff]
    %v352 = vld [vmem:[#allocation2 + $0xc0] sm:$0xff]
    %v353 = vld [vmem:[#allocation2 + $0xc8] sm:$0xff]
    %v354 = vld [vmem:[#allocation2 + $0xd0] sm:$0xff]
    %v355 = vld [vmem:[#allocation2 + $0xd8] sm:$0xff]
    %v356 = vld [vmem:[#allocation2 + $0xe0] sm:$0xff]
    %v357 = vld [vmem:[#allocation2 + $0xe8] sm:$0xff]
    %v358 = vld [vmem:[#allocation2 + $0xf0] sm:$0xff]
    %v359 = vld [vmem:[#allocation2 + $0xf8] sm:$0xff]
    %v360 = vld [vmem:[#allocation4] sm:$0x3]
    %v361 = vld [vmem:[#allocation5] sm:$0x3]
    %v362 = vld [vmem:[%s0] sm:$0xff]
    %v363 = vpack.c.bf16 %v360, %v360
    %364 = vmatprep.subr.bf16.mxu0 %v329
    %365 = vmatpush1.bf16.msra.mxu0 %v328
    %366 = vmatprep.subr.bf16.mxu0 %v333
    %367 = vmatpush1.bf16.msra.mxu0 %v332
    %368 = vmatprep.subr.bf16.mxu0 %v337
    %369 = vmatpush1.bf16.msra.mxu0 %v336
    %370 = vmatprep.subr.bf16.mxu0 %v341
    %371 = vmatpush1.bf16.msra.mxu0 %v340
    %372 = vmatprep.subr.bf16.mxu0 %v345
    %373 = vmatpush1.bf16.msra.mxu0 %v344
    %374 = vmatprep.subr.bf16.mxu0 %v349
    %375 = vmatpush1.bf16.msra.mxu0 %v348
    %376 = vmatprep.subr.bf16.mxu0 %v353
    %377 = vmatpush1.bf16.msra.mxu0 %v352
    %378 = vmatprep.subr.bf16.mxu0 %v357
    %379 = vmatpush1.bf16.msra.mxu0 %v356
    %380 = vmatprep.subr.bf16.mxu0 0
    %381 = vmatpush1.bf16.msra.mxu0 0
    %382 = vmatprep.subr.bf16.mxu0 0
    %383 = vmatpush1.bf16.msra.mxu0 0
    %384 = vmatprep.subr.bf16.mxu0 0
    %385 = vmatpush1.bf16.msra.mxu0 0
    %386 = vmatprep.subr.bf16.mxu0 0
    %387 = vmatpush1.bf16.msra.mxu0 0
    %388 = vmatprep.subr.bf16.mxu0 0
    %389 = vmatpush1.bf16.msra.mxu0 0
    %390 = vmatprep.subr.bf16.mxu0 0
    %391 = vmatpush1.bf16.msra.mxu0 0
    %392 = vmatprep.subr.bf16.mxu0 0
    %393 = vmatpush1.bf16.msra.mxu0 0
    %394 = vmatprep.subr.bf16.mxu0 0
    %395 = vmatpush1.bf16.msra.mxu0 0
    %396 = vmatprep.mubr.bf16.mxu0 0
    %397 = vmatmul.mubr.bf16.gmra.mrb[0].mxu0 %v363
    %v398 = vpop.f32.mrb[0].mxu0
    %v399 = vadd.f32 0.0, %v398
    %v400 = vpop.f32.mrb[0].mxu0
    %v401 = vadd.f32 0.0, %v400
    %v402 = vpop.f32.mrb[0].mxu0
    %v403 = vpop.f32.mrb[0].mxu0
    %404 = vdwg.mxu0
    %405 = vmatprep.subr.bf16.mxu0 %v331
    %406 = vmatpush1.bf16.msra.mxu0 %v330
    %407 = vmatprep.subr.bf16.mxu0 %v335
    %408 = vmatpush1.bf16.msra.mxu0 %v334
    %409 = vmatprep.subr.bf16.mxu0 %v339
    %410 = vmatpush1.bf16.msra.mxu0 %v338
    %411 = vmatprep.subr.bf16.mxu0 %v343
    %412 = vmatpush1.bf16.msra.mxu0 %v342
    %413 = vmatprep.subr.bf16.mxu0 %v347
    %414 = vmatpush1.bf16.msra.mxu0 %v346
    %415 = vmatprep.subr.bf16.mxu0 %v351
    %416 = vmatpush1.bf16.msra.mxu0 %v350
    %417 = vmatprep.subr.bf16.mxu0 %v355
    %418 = vmatpush1.bf16.msra.mxu0 %v354
    %419 = vmatprep.subr.bf16.mxu0 %v359
    %420 = vmatpush1.bf16.msra.mxu0 %v358
    %421 = vmatprep.subr.bf16.mxu0 0
    %422 = vmatpush1.bf16.msra.mxu0 0
    %423 = vmatprep.subr.bf16.mxu0 0
    %424 = vmatpush1.bf16.msra.mxu0 0
    %425 = vmatprep.subr.bf16.mxu0 0
    %426 = vmatpush1.bf16.msra.mxu0 0
    %427 = vmatprep.subr.bf16.mxu0 0
    %428 = vmatpush1.bf16.msra.mxu0 0
    %429 = vmatprep.subr.bf16.mxu0 0
    %430 = vmatpush1.bf16.msra.mxu0 0
    %431 = vmatprep.subr.bf16.mxu0 0
    %432 = vmatpush1.bf16.msra.mxu0 0
    %433 = vmatprep.subr.bf16.mxu0 0
    %434 = vmatpush1.bf16.msra.mxu0 0
    %435 = vmatprep.subr.bf16.mxu0 0
    %436 = vmatpush1.bf16.msra.mxu0 0
    %437 = vmatprep.mubr.bf16.mxu0 0
    %438 = vmatmul.mubr.bf16.gmra.mrb[0].mxu0 %v363
    %v439 = vpop.f32.mrb[0].mxu0
    %v440 = vadd.f32 0.0, %v439
    %v441 = vpop.f32.mrb[0].mxu0
    %v442 = vadd.f32 0.0, %v441
    %v443 = vpop.f32.mrb[0].mxu0
    %v444 = vpop.f32.mrb[0].mxu0
    %445 = vdwg.mxu0
    %v450 = vcombine.low %v399, %v401
    %v451 = vcombine.low %v440, %v442
    %v453 = vunpack.c.l.s4 1983009808
    %v454 = vunpack.c.0.s8 %v453
    %v455 = vlaneseq
    %v456 = vshrl.u32 %v455, 7
    %v457 = vsub.s32 %v454, %v456
    %v458 = vrot.slane %v450, %v457
    %v460 = vunpack.c.l.s4 1983009808
    %v461 = vunpack.c.0.s8 %v460
    %v462 = vlaneseq
    %v463 = vshrl.u32 %v462, 7
    %v464 = vsub.s32 %v461, %v463
    %v465 = vrot.slane %v451, %v464
    %v466 = vcombine.low %v458, %v465
    %v468 = vadd.f32 %v362, %v466
    %v469 = vsub.f32 0.0, %v468
    %v470 = vmul.f32 %v469, 1.442695
    %v471 = vpow.pop %v470
    %v472 = vadd.f32 %v471, 1.0
    %v473 = vrcp.pop %v472
    %v475 = vrot.slane %v468, 2
    %v477 = vsub.f32 0.0, %v475
    %v478 = vmul.f32 %v477, 1.442695
    %v479 = vpow.pop %v478
    %v480 = vadd.f32 %v479, 1.0
    %v481 = vrcp.pop %v480
    %v482 = vrot.slane %v468, 4
    %v484 = vtanh.pop %v482
    %v485 = vrot.slane %v468, 6
    %v487 = vsub.f32 0.0, %v485
    %v488 = vmul.f32 %v487, 1.442695
    %v489 = vpow.pop %v488
    %v490 = vadd.f32 %v489, 1.0
    %v491 = vrcp.pop %v490
    %v492 = vmul.f32 %v481, %v361
    %v493 = vmul.f32 %v473, %v484
    %v494 = vadd.f32 %v492, %v493
    %v495 = vtanh.pop %v494
    %v496 = vmul.f32 %v491, %v495
    %s497 = scalar_lea.vmem %s0, 8
    %v498 = vld [vmem:[%s497] sm:$0xff]
    %v499 = vpack.c.bf16 %v496, %v496
    %500 = vmatprep.subr.bf16.mxu0 %v329
    %501 = vmatpush1.bf16.msra.mxu0 %v328
    %502 = vmatprep.subr.bf16.mxu0 %v333
    %503 = vmatpush1.bf16.msra.mxu0 %v332
    %504 = vmatprep.subr.bf16.mxu0 %v337
    %505 = vmatpush1.bf16.msra.mxu0 %v336
    %506 = vmatprep.subr.bf16.mxu0 %v341
    %507 = vmatpush1.bf16.msra.mxu0 %v340
    %508 = vmatprep.subr.bf16.mxu0 %v345
    %509 = vmatpush1.bf16.msra.mxu0 %v344
    %510 = vmatprep.subr.bf16.mxu0 %v349
    %511 = vmatpush1.bf16.msra.mxu0 %v348
    %512 = vmatprep.subr.bf16.mxu0 %v353
    %513 = vmatpush1.bf16.msra.mxu0 %v352
    %514 = vmatprep.subr.bf16.mxu0 %v357
    %515 = vmatpush1.bf16.msra.mxu0 %v356
    %516 = vmatprep.subr.bf16.mxu0 0
    %517 = vmatpush1.bf16.msra.mxu0 0
    %518 = vmatprep.subr.bf16.mxu0 0
    %519 = vmatpush1.bf16.msra.mxu0 0
    %520 = vmatprep.subr.bf16.mxu0 0
    %521 = vmatpush1.bf16.msra.mxu0 0
    %522 = vmatprep.subr.bf16.mxu0 0
    %523 = vmatpush1.bf16.msra.mxu0 0
    %524 = vmatprep.subr.bf16.mxu0 0
    %525 = vmatpush1.bf16.msra.mxu0 0
    %526 = vmatprep.subr.bf16.mxu0 0
    %527 = vmatpush1.bf16.msra.mxu0 0
    %528 = vmatprep.subr.bf16.mxu0 0
    %529 = vmatpush1.bf16.msra.mxu0 0
    %530 = vmatprep.subr.bf16.mxu0 0
    %531 = vmatpush1.bf16.msra.mxu0 0
    %532 = vmatprep.mubr.bf16.mxu0 0
    %533 = vmatmul.mubr.bf16.gmra.mrb[0].mxu0 %v499
    %v534 = vpop.f32.mrb[0].mxu0
    %v535 = vadd.f32 0.0, %v534
    %v536 = vpop.f32.mrb[0].mxu0
    %v537 = vadd.f32 0.0, %v536
    %v538 = vpop.f32.mrb[0].mxu0
    %v539 = vpop.f32.mrb[0].mxu0
    %540 = vdwg.mxu0
    %541 = vmatprep.subr.bf16.mxu0 %v331
    %542 = vmatpush1.bf16.msra.mxu0 %v330
    %543 = vmatprep.subr.bf16.mxu0 %v335
    %544 = vmatpush1.bf16.msra.mxu0 %v334
    %545 = vmatprep.subr.bf16.mxu0 %v339
    %546 = vmatpush1.bf16.msra.mxu0 %v338
    %547 = vmatprep.subr.bf16.mxu0 %v343
    %548 = vmatpush1.bf16.msra.mxu0 %v342
    %549 = vmatprep.subr.bf16.mxu0 %v347
    %550 = vmatpush1.bf16.msra.mxu0 %v346
    %551 = vmatprep.subr.bf16.mxu0 %v351
    %552 = vmatpush1.bf16.msra.mxu0 %v350
    %553 = vmatprep.subr.bf16.mxu0 %v355
    %554 = vmatpush1.bf16.msra.mxu0 %v354
    %555 = vmatprep.subr.bf16.mxu0 %v359
    %556 = vmatpush1.bf16.msra.mxu0 %v358
    %557 = vmatprep.subr.bf16.mxu0 0
    %558 = vmatpush1.bf16.msra.mxu0 0
    %559 = vmatprep.subr.bf16.mxu0 0
    %560 = vmatpush1.bf16.msra.mxu0 0
    %561 = vmatprep.subr.bf16.mxu0 0
    %562 = vmatpush1.bf16.msra.mxu0 0
    %563 = vmatprep.subr.bf16.mxu0 0
    %564 = vmatpush1.bf16.msra.mxu0 0
    %565 = vmatprep.subr.bf16.mxu0 0
    %566 = vmatpush1.bf16.msra.mxu0 0
    %567 = vmatprep.subr.bf16.mxu0 0
    %568 = vmatpush1.bf16.msra.mxu0 0
    %569 = vmatprep.subr.bf16.mxu0 0
    %570 = vmatpush1.bf16.msra.mxu0 0
    %571 = vmatprep.subr.bf16.mxu0 0
    %572 = vmatpush1.bf16.msra.mxu0 0
    %573 = vmatprep.mubr.bf16.mxu0 0
    %574 = vmatmul.mubr.bf16.gmra.mrb[0].mxu0 %v499
    %v575 = vpop.f32.mrb[0].mxu0
    %v576 = vadd.f32 0.0, %v575
    %v577 = vpop.f32.mrb[0].mxu0
    %v578 = vadd.f32 0.0, %v577
    %v579 = vpop.f32.mrb[0].mxu0
    %v580 = vpop.f32.mrb[0].mxu0
    %581 = vdwg.mxu0
    %v586 = vcombine.low %v535, %v537
    %v587 = vcombine.low %v576, %v578
    %v589 = vunpack.c.l.s4 1983009808
    %v590 = vunpack.c.0.s8 %v589
    %v591 = vlaneseq
    %v592 = vshrl.u32 %v591, 7
    %v593 = vsub.s32 %v590, %v592
    %v594 = vrot.slane %v586, %v593
    %v596 = vunpack.c.l.s4 1983009808
    %v597 = vunpack.c.0.s8 %v596
    %v598 = vlaneseq
    %v599 = vshrl.u32 %v598, 7
    %v600 = vsub.s32 %v597, %v599
    %v601 = vrot.slane %v587, %v600
    %v602 = vcombine.low %v594, %v601
    %v604 = vadd.f32 %v498, %v602
    %v605 = vsub.f32 0.0, %v604
    %v606 = vmul.f32 %v605, 1.442695
    %v607 = vpow.pop %v606
    %v608 = vadd.f32 %v607, 1.0
    %v609 = vrcp.pop %v608
    %v611 = vrot.slane %v604, 2
    %v613 = vsub.f32 0.0, %v611
    %v614 = vmul.f32 %v613, 1.442695
    %v615 = vpow.pop %v614
    %v616 = vadd.f32 %v615, 1.0
    %v617 = vrcp.pop %v616
    %v618 = vrot.slane %v604, 4
    %v620 = vtanh.pop %v618
    %v621 = vrot.slane %v604, 6
    %v623 = vsub.f32 0.0, %v621
    %v624 = vmul.f32 %v623, 1.442695
    %v625 = vpow.pop %v624
    %v626 = vadd.f32 %v625, 1.0
    %v627 = vrcp.pop %v626
    %v628 = vmul.f32 %v617, %v494
    %v629 = vmul.f32 %v609, %v620
    %v630 = vadd.f32 %v628, %v629
    %v631 = vtanh.pop %v630
    %v632 = vmul.f32 %v627, %v631
    %s633 = scalar_lea.vmem %s0, 16
    %v634 = vld [vmem:[%s633] sm:$0xff]
    %v635 = vpack.c.bf16 %v632, %v632
    %636 = vmatprep.subr.bf16.mxu0 %v329
    %637 = vmatpush1.bf16.msra.mxu0 %v328
    %638 = vmatprep.subr.bf16.mxu0 %v333
    %639 = vmatpush1.bf16.msra.mxu0 %v332
    %640 = vmatprep.subr.bf16.mxu0 %v337
    %641 = vmatpush1.bf16.msra.mxu0 %v336
    %642 = vmatprep.subr.bf16.mxu0 %v341
    %643 = vmatpush1.bf16.msra.mxu0 %v340
    %644 = vmatprep.subr.bf16.mxu0 %v345
    %645 = vmatpush1.bf16.msra.mxu0 %v344
    %646 = vmatprep.subr.bf16.mxu0 %v349
    %647 = vmatpush1.bf16.msra.mxu0 %v348
    %648 = vmatprep.subr.bf16.mxu0 %v353
    %649 = vmatpush1.bf16.msra.mxu0 %v352
    %650 = vmatprep.subr.bf16.mxu0 %v357
    %651 = vmatpush1.bf16.msra.mxu0 %v356
    %652 = vmatprep.subr.bf16.mxu0 0
    %653 = vmatpush1.bf16.msra.mxu0 0
    %654 = vmatprep.subr.bf16.mxu0 0
    %655 = vmatpush1.bf16.msra.mxu0 0
    %656 = vmatprep.subr.bf16.mxu0 0
    %657 = vmatpush1.bf16.msra.mxu0 0
    %658 = vmatprep.subr.bf16.mxu0 0
    %659 = vmatpush1.bf16.msra.mxu0 0
    %660 = vmatprep.subr.bf16.mxu0 0
    %661 = vmatpush1.bf16.msra.mxu0 0
    %662 = vmatprep.subr.bf16.mxu0 0
    %663 = vmatpush1.bf16.msra.mxu0 0
    %664 = vmatprep.subr.bf16.mxu0 0
    %665 = vmatpush1.bf16.msra.mxu0 0
    %666 = vmatprep.subr.bf16.mxu0 0
    %667 = vmatpush1.bf16.msra.mxu0 0
    %668 = vmatprep.mubr.bf16.mxu0 0
    %669 = vmatmul.mubr.bf16.gmra.mrb[0].mxu0 %v635
    %v670 = vpop.f32.mrb[0].mxu0
    %v671 = vadd.f32 0.0, %v670
    %v672 = vpop.f32.mrb[0].mxu0
    %v673 = vadd.f32 0.0, %v672
    %v674 = vpop.f32.mrb[0].mxu0
    %v675 = vpop.f32.mrb[0].mxu0
    %676 = vdwg.mxu0
    %677 = vmatprep.subr.bf16.mxu0 %v331
    %678 = vmatpush1.bf16.msra.mxu0 %v330
    %679 = vmatprep.subr.bf16.mxu0 %v335
    %680 = vmatpush1.bf16.msra.mxu0 %v334
    %681 = vmatprep.subr.bf16.mxu0 %v339
    %682 = vmatpush1.bf16.msra.mxu0 %v338
    %683 = vmatprep.subr.bf16.mxu0 %v343
    %684 = vmatpush1.bf16.msra.mxu0 %v342
    %685 = vmatprep.subr.bf16.mxu0 %v347
    %686 = vmatpush1.bf16.msra.mxu0 %v346
    %687 = vmatprep.subr.bf16.mxu0 %v351
    %688 = vmatpush1.bf16.msra.mxu0 %v350
    %689 = vmatprep.subr.bf16.mxu0 %v355
    %690 = vmatpush1.bf16.msra.mxu0 %v354
    %691 = vmatprep.subr.bf16.mxu0 %v359
    %692 = vmatpush1.bf16.msra.mxu0 %v358
    %693 = vmatprep.subr.bf16.mxu0 0
    %694 = vmatpush1.bf16.msra.mxu0 0
    %695 = vmatprep.subr.bf16.mxu0 0
    %696 = vmatpush1.bf16.msra.mxu0 0
    %697 = vmatprep.subr.bf16.mxu0 0
    %698 = vmatpush1.bf16.msra.mxu0 0
    %699 = vmatprep.subr.bf16.mxu0 0
    %700 = vmatpush1.bf16.msra.mxu0 0
    %701 = vmatprep.subr.bf16.mxu0 0
    %702 = vmatpush1.bf16.msra.mxu0 0
    %703 = vmatprep.subr.bf16.mxu0 0
    %704 = vmatpush1.bf16.msra.mxu0 0
    %705 = vmatprep.subr.bf16.mxu0 0
    %706 = vmatpush1.bf16.msra.mxu0 0
    %707 = vmatprep.subr.bf16.mxu0 0
    %708 = vmatpush1.bf16.msra.mxu0 0
    %709 = vmatprep.mubr.bf16.mxu0 0
    %710 = vmatmul.mubr.bf16.gmra.mrb[0].mxu0 %v635
    %v711 = vpop.f32.mrb[0].mxu0
    %v712 = vadd.f32 0.0, %v711
    %v713 = vpop.f32.mrb[0].mxu0
    %v714 = vadd.f32 0.0, %v713
    %v715 = vpop.f32.mrb[0].mxu0
    %v716 = vpop.f32.mrb[0].mxu0
    %717 = vdwg.mxu0
    %v722 = vcombine.low %v671, %v673
    %v723 = vcombine.low %v712, %v714
    %v725 = vunpack.c.l.s4 1983009808
    %v726 = vunpack.c.0.s8 %v725
    %v727 = vlaneseq
    %v728 = vshrl.u32 %v727, 7
    %v729 = vsub.s32 %v726, %v728
    %v730 = vrot.slane %v722, %v729
    %v732 = vunpack.c.l.s4 1983009808
    %v733 = vunpack.c.0.s8 %v732
    %v734 = vlaneseq
    %v735 = vshrl.u32 %v734, 7
    %v736 = vsub.s32 %v733, %v735
    %v737 = vrot.slane %v723, %v736
    %v738 = vcombine.low %v730, %v737
    %v740 = vadd.f32 %v634, %v738
    %v741 = vsub.f32 0.0, %v740
    %v742 = vmul.f32 %v741, 1.442695
    %v743 = vpow.pop %v742
    %v744 = vadd.f32 %v743, 1.0
    %v745 = vrcp.pop %v744
    %v747 = vrot.slane %v740, 2
    %v749 = vsub.f32 0.0, %v747
    %v750 = vmul.f32 %v749, 1.442695
    %v751 = vpow.pop %v750
    %v752 = vadd.f32 %v751, 1.0
    %v753 = vrcp.pop %v752
    %v754 = vrot.slane %v740, 4
    %v756 = vtanh.pop %v754
    %v757 = vrot.slane %v740, 6
    %v759 = vsub.f32 0.0, %v757
    %v760 = vmul.f32 %v759, 1.442695
    %v761 = vpow.pop %v760
    %v762 = vadd.f32 %v761, 1.0
    %v763 = vrcp.pop %v762
    %v764 = vmul.f32 %v753, %v630
    %v765 = vmul.f32 %v745, %v756
    %v766 = vadd.f32 %v764, %v765
    %v767 = vtanh.pop %v766
    %v768 = vmul.f32 %v763, %v767
    %s769 = scalar_lea.vmem %s0, 24
    %v770 = vld [vmem:[%s769] sm:$0xff]
    %v771 = vpack.c.bf16 %v768, %v768
    %772 = vmatprep.subr.bf16.mxu0 %v329
    %773 = vmatpush1.bf16.msra.mxu0 %v328
    %774 = vmatprep.subr.bf16.mxu0 %v333
    %775 = vmatpush1.bf16.msra.mxu0 %v332
    %776 = vmatprep.subr.bf16.mxu0 %v337
    %777 = vmatpush1.bf16.msra.mxu0 %v336
    %778 = vmatprep.subr.bf16.mxu0 %v341
    %779 = vmatpush1.bf16.msra.mxu0 %v340
    %780 = vmatprep.subr.bf16.mxu0 %v345
    %781 = vmatpush1.bf16.msra.mxu0 %v344
    %782 = vmatprep.subr.bf16.mxu0 %v349
    %783 = vmatpush1.bf16.msra.mxu0 %v348
    %784 = vmatprep.subr.bf16.mxu0 %v353
    %785 = vmatpush1.bf16.msra.mxu0 %v352
    %786 = vmatprep.subr.bf16.mxu0 %v357
    %787 = vmatpush1.bf16.msra.mxu0 %v356
    %788 = vmatprep.subr.bf16.mxu0 0
    %789 = vmatpush1.bf16.msra.mxu0 0
    %790 = vmatprep.subr.bf16.mxu0 0
    %791 = vmatpush1.bf16.msra.mxu0 0
    %792 = vmatprep.subr.bf16.mxu0 0
    %793 = vmatpush1.bf16.msra.mxu0 0
    %794 = vmatprep.subr.bf16.mxu0 0
    %795 = vmatpush1.bf16.msra.mxu0 0
    %796 = vmatprep.subr.bf16.mxu0 0
    %797 = vmatpush1.bf16.msra.mxu0 0
    %798 = vmatprep.subr.bf16.mxu0 0
    %799 = vmatpush1.bf16.msra.mxu0 0
    %800 = vmatprep.subr.bf16.mxu0 0
    %801 = vmatpush1.bf16.msra.mxu0 0
    %802 = vmatprep.subr.bf16.mxu0 0
    %803 = vmatpush1.bf16.msra.mxu0 0
    %804 = vmatprep.mubr.bf16.mxu0 0
    %805 = vmatmul.mubr.bf16.gmra.mrb[0].mxu0 %v771
    %v806 = vpop.f32.mrb[0].mxu0
    %v807 = vadd.f32 0.0, %v806
    %v808 = vpop.f32.mrb[0].mxu0
    %v809 = vadd.f32 0.0, %v808
    %v810 = vpop.f32.mrb[0].mxu0
    %v811 = vpop.f32.mrb[0].mxu0
    %812 = vdwg.mxu0
    %813 = vmatprep.subr.bf16.mxu0 %v331
    %814 = vmatpush1.bf16.msra.mxu0 %v330
    %815 = vmatprep.subr.bf16.mxu0 %v335
    %816 = vmatpush1.bf16.msra.mxu0 %v334
    %817 = vmatprep.subr.bf16.mxu0 %v339
    %818 = vmatpush1.bf16.msra.mxu0 %v338
    %819 = vmatprep.subr.bf16.mxu0 %v343
    %820 = vmatpush1.bf16.msra.mxu0 %v342
    %821 = vmatprep.subr.bf16.mxu0 %v347
    %822 = vmatpush1.bf16.msra.mxu0 %v346
    %823 = vmatprep.subr.bf16.mxu0 %v351
    %824 = vmatpush1.bf16.msra.mxu0 %v350
    %825 = vmatprep.subr.bf16.mxu0 %v355
    %826 = vmatpush1.bf16.msra.mxu0 %v354
    %827 = vmatprep.subr.bf16.mxu0 %v359
    %828 = vmatpush1.bf16.msra.mxu0 %v358
    %829 = vmatprep.subr.bf16.mxu0 0
    %830 = vmatpush1.bf16.msra.mxu0 0
    %831 = vmatprep.subr.bf16.mxu0 0
    %832 = vmatpush1.bf16.msra.mxu0 0
    %833 = vmatprep.subr.bf16.mxu0 0
    %834 = vmatpush1.bf16.msra.mxu0 0
    %835 = vmatprep.subr.bf16.mxu0 0
    %836 = vmatpush1.bf16.msra.mxu0 0
    %837 = vmatprep.subr.bf16.mxu0 0
    %838 = vmatpush1.bf16.msra.mxu0 0
    %839 = vmatprep.subr.bf16.mxu0 0
    %840 = vmatpush1.bf16.msra.mxu0 0
    %841 = vmatprep.subr.bf16.mxu0 0
    %842 = vmatpush1.bf16.msra.mxu0 0
    %843 = vmatprep.subr.bf16.mxu0 0
    %844 = vmatpush1.bf16.msra.mxu0 0
    %845 = vmatprep.mubr.bf16.mxu0 0
    %846 = vmatmul.mubr.bf16.gmra.mrb[0].mxu0 %v771
    %v847 = vpop.f32.mrb[0].mxu0
    %v848 = vadd.f32 0.0, %v847
    %v849 = vpop.f32.mrb[0].mxu0
    %v850 = vadd.f32 0.0, %v849
    %v851 = vpop.f32.mrb[0].mxu0
    %v852 = vpop.f32.mrb[0].mxu0
    %853 = vdwg.mxu0
    %v858 = vcombine.low %v807, %v809
    %v859 = vcombine.low %v848, %v850
    %v861 = vunpack.c.l.s4 1983009808
    %v862 = vunpack.c.0.s8 %v861
    %v863 = vlaneseq
    %v864 = vshrl.u32 %v863, 7
    %v865 = vsub.s32 %v862, %v864
    %v866 = vrot.slane %v858, %v865
    %v868 = vunpack.c.l.s4 1983009808
    %v869 = vunpack.c.0.s8 %v868
    %v870 = vlaneseq
    %v871 = vshrl.u32 %v870, 7
    %v872 = vsub.s32 %v869, %v871
    %v873 = vrot.slane %v859, %v872
    %v874 = vcombine.low %v866, %v873
    %v876 = vadd.f32 %v770, %v874
    %v877 = vsub.f32 0.0, %v876
    %v878 = vmul.f32 %v877, 1.442695
    %v879 = vpow.pop %v878
    %v880 = vadd.f32 %v879, 1.0
    %v881 = vrcp.pop %v880
    %v883 = vrot.slane %v876, 2
    %v885 = vsub.f32 0.0, %v883
    %v886 = vmul.f32 %v885, 1.442695
    %v887 = vpow.pop %v886
    %v888 = vadd.f32 %v887, 1.0
    %v889 = vrcp.pop %v888
    %v890 = vrot.slane %v876, 4
    %v892 = vtanh.pop %v890
    %v893 = vrot.slane %v876, 6
    %v895 = vsub.f32 0.0, %v893
    %v896 = vmul.f32 %v895, 1.442695
    %v897 = vpow.pop %v896
    %v898 = vadd.f32 %v897, 1.0
    %v899 = vrcp.pop %v898
    %v900 = vmul.f32 %v889, %v766
    %v901 = vmul.f32 %v881, %v892
    %v902 = vadd.f32 %v900, %v901
    %v903 = vtanh.pop %v902
    %v904 = vmul.f32 %v899, %v903
    %s905 = scalar_lea.vmem %s0, 32
    %v906 = vld [vmem:[%s905] sm:$0xff]
    %v907 = vpack.c.bf16 %v904, %v904
    %908 = vmatprep.subr.bf16.mxu0 %v329
    %909 = vmatpush1.bf16.msra.mxu0 %v328
    %910 = vmatprep.subr.bf16.mxu0 %v333
    %911 = vmatpush1.bf16.msra.mxu0 %v332
    %912 = vmatprep.subr.bf16.mxu0 %v337
    %913 = vmatpush1.bf16.msra.mxu0 %v336
    %914 = vmatprep.subr.bf16.mxu0 %v341
    %915 = vmatpush1.bf16.msra.mxu0 %v340
    %916 = vmatprep.subr.bf16.mxu0 %v345
    %917 = vmatpush1.bf16.msra.mxu0 %v344
    %918 = vmatprep.subr.bf16.mxu0 %v349
    %919 = vmatpush1.bf16.msra.mxu0 %v348
    %920 = vmatprep.subr.bf16.mxu0 %v353
    %921 = vmatpush1.bf16.msra.mxu0 %v352
    %922 = vmatprep.subr.bf16.mxu0 %v357
    %923 = vmatpush1.bf16.msra.mxu0 %v356
    %924 = vmatprep.subr.bf16.mxu0 0
    %925 = vmatpush1.bf16.msra.mxu0 0
    %926 = vmatprep.subr.bf16.mxu0 0
    %927 = vmatpush1.bf16.msra.mxu0 0
    %928 = vmatprep.subr.bf16.mxu0 0
    %929 = vmatpush1.bf16.msra.mxu0 0
    %930 = vmatprep.subr.bf16.mxu0 0
    %931 = vmatpush1.bf16.msra.mxu0 0
    %932 = vmatprep.subr.bf16.mxu0 0
    %933 = vmatpush1.bf16.msra.mxu0 0
    %934 = vmatprep.subr.bf16.mxu0 0
    %935 = vmatpush1.bf16.msra.mxu0 0
    %936 = vmatprep.subr.bf16.mxu0 0
    %937 = vmatpush1.bf16.msra.mxu0 0
    %938 = vmatprep.subr.bf16.mxu0 0
    %939 = vmatpush1.bf16.msra.mxu0 0
    %940 = vmatprep.mubr.bf16.mxu0 0
    %941 = vmatmul.mubr.bf16.gmra.mrb[0].mxu0 %v907
    %v942 = vpop.f32.mrb[0].mxu0
    %v943 = vadd.f32 0.0, %v942
    %v944 = vpop.f32.mrb[0].mxu0
    %v945 = vadd.f32 0.0, %v944
    %v946 = vpop.f32.mrb[0].mxu0
    %v947 = vpop.f32.mrb[0].mxu0
    %948 = vdwg.mxu0
    %949 = vmatprep.subr.bf16.mxu0 %v331
    %950 = vmatpush1.bf16.msra.mxu0 %v330
    %951 = vmatprep.subr.bf16.mxu0 %v335
    %952 = vmatpush1.bf16.msra.mxu0 %v334
    %953 = vmatprep.subr.bf16.mxu0 %v339
    %954 = vmatpush1.bf16.msra.mxu0 %v338
    %955 = vmatprep.subr.bf16.mxu0 %v343
    %956 = vmatpush1.bf16.msra.mxu0 %v342
    %957 = vmatprep.subr.bf16.mxu0 %v347
    %958 = vmatpush1.bf16.msra.mxu0 %v346
    %959 = vmatprep.subr.bf16.mxu0 %v351
    %960 = vmatpush1.bf16.msra.mxu0 %v350
    %961 = vmatprep.subr.bf16.mxu0 %v355
    %962 = vmatpush1.bf16.msra.mxu0 %v354
    %963 = vmatprep.subr.bf16.mxu0 %v359
    %964 = vmatpush1.bf16.msra.mxu0 %v358
    %965 = vmatprep.subr.bf16.mxu0 0
    %966 = vmatpush1.bf16.msra.mxu0 0
    %967 = vmatprep.subr.bf16.mxu0 0
    %968 = vmatpush1.bf16.msra.mxu0 0
    %969 = vmatprep.subr.bf16.mxu0 0
    %970 = vmatpush1.bf16.msra.mxu0 0
    %971 = vmatprep.subr.bf16.mxu0 0
    %972 = vmatpush1.bf16.msra.mxu0 0
    %973 = vmatprep.subr.bf16.mxu0 0
    %974 = vmatpush1.bf16.msra.mxu0 0
    %975 = vmatprep.subr.bf16.mxu0 0
    %976 = vmatpush1.bf16.msra.mxu0 0
    %977 = vmatprep.subr.bf16.mxu0 0
    %978 = vmatpush1.bf16.msra.mxu0 0
    %979 = vmatprep.subr.bf16.mxu0 0
    %980 = vmatpush1.bf16.msra.mxu0 0
    %981 = vmatprep.mubr.bf16.mxu0 0
    %982 = vmatmul.mubr.bf16.gmra.mrb[0].mxu0 %v907
    %v983 = vpop.f32.mrb[0].mxu0
    %v984 = vadd.f32 0.0, %v983
    %v985 = vpop.f32.mrb[0].mxu0
    %v986 = vadd.f32 0.0, %v985
    %v987 = vpop.f32.mrb[0].mxu0
    %v988 = vpop.f32.mrb[0].mxu0
    %989 = vdwg.mxu0
    %v994 = vcombine.low %v943, %v945
    %v995 = vcombine.low %v984, %v986
    %v997 = vunpack.c.l.s4 1983009808
    %v998 = vunpack.c.0.s8 %v997
    %v999 = vlaneseq
    %v1000 = vshrl.u32 %v999, 7
    %v1001 = vsub.s32 %v998, %v1000
    %v1002 = vrot.slane %v994, %v1001
    %v1004 = vunpack.c.l.s4 1983009808
    %v1005 = vunpack.c.0.s8 %v1004
    %v1006 = vlaneseq
    %v1007 = vshrl.u32 %v1006, 7
    %v1008 = vsub.s32 %v1005, %v1007
    %v1009 = vrot.slane %v995, %v1008
    %v1010 = vcombine.low %v1002, %v1009
    %v1012 = vadd.f32 %v906, %v1010
    %v1013 = vsub.f32 0.0, %v1012
    %v1014 = vmul.f32 %v1013, 1.442695
    %v1015 = vpow.pop %v1014
    %v1016 = vadd.f32 %v1015, 1.0
    %v1017 = vrcp.pop %v1016
    %v1019 = vrot.slane %v1012, 2
    %v1021 = vsub.f32 0.0, %v1019
    %v1022 = vmul.f32 %v1021, 1.442695
    %v1023 = vpow.pop %v1022
    %v1024 = vadd.f32 %v1023, 1.0
    %v1025 = vrcp.pop %v1024
    %v1026 = vrot.slane %v1012, 4
    %v1028 = vtanh.pop %v1026
    %v1029 = vrot.slane %v1012, 6
    %v1031 = vsub.f32 0.0, %v1029
    %v1032 = vmul.f32 %v1031, 1.442695
    %v1033 = vpow.pop %v1032
    %v1034 = vadd.f32 %v1033, 1.0
    %v1035 = vrcp.pop %v1034
    %v1036 = vmul.f32 %v1025, %v902
    %v1037 = vmul.f32 %v1017, %v1028
    %v1038 = vadd.f32 %v1036, %v1037
    %v1039 = vtanh.pop %v1038
    %v1040 = vmul.f32 %v1035, %v1039
    %s1041 = scalar_lea.vmem %s0, 40
    %v1042 = vld [vmem:[%s1041] sm:$0xff]
    %v1043 = vpack.c.bf16 %v1040, %v1040
    %1044 = vmatprep.subr.bf16.mxu0 %v329
    %1045 = vmatpush1.bf16.msra.mxu0 %v328
    %1046 = vmatprep.subr.bf16.mxu0 %v333
    %1047 = vmatpush1.bf16.msra.mxu0 %v332
    %1048 = vmatprep.subr.bf16.mxu0 %v337
    %1049 = vmatpush1.bf16.msra.mxu0 %v336
    %1050 = vmatprep.subr.bf16.mxu0 %v341
    %1051 = vmatpush1.bf16.msra.mxu0 %v340
    %1052 = vmatprep.subr.bf16.mxu0 %v345
    %1053 = vmatpush1.bf16.msra.mxu0 %v344
    %1054 = vmatprep.subr.bf16.mxu0 %v349
    %1055 = vmatpush1.bf16.msra.mxu0 %v348
    %1056 = vmatprep.subr.bf16.mxu0 %v353
    %1057 = vmatpush1.bf16.msra.mxu0 %v352
    %1058 = vmatprep.subr.bf16.mxu0 %v357
    %1059 = vmatpush1.bf16.msra.mxu0 %v356
    %1060 = vmatprep.subr.bf16.mxu0 0
    %1061 = vmatpush1.bf16.msra.mxu0 0
    %1062 = vmatprep.subr.bf16.mxu0 0
    %1063 = vmatpush1.bf16.msra.mxu0 0
    %1064 = vmatprep.subr.bf16.mxu0 0
    %1065 = vmatpush1.bf16.msra.mxu0 0
    %1066 = vmatprep.subr.bf16.mxu0 0
    %1067 = vmatpush1.bf16.msra.mxu0 0
    %1068 = vmatprep.subr.bf16.mxu0 0
    %1069 = vmatpush1.bf16.msra.mxu0 0
    %1070 = vmatprep.subr.bf16.mxu0 0
    %1071 = vmatpush1.bf16.msra.mxu0 0
    %1072 = vmatprep.subr.bf16.mxu0 0
    %1073 = vmatpush1.bf16.msra.mxu0 0
    %1074 = vmatprep.subr.bf16.mxu0 0
    %1075 = vmatpush1.bf16.msra.mxu0 0
    %1076 = vmatprep.mubr.bf16.mxu0 0
    %1077 = vmatmul.mubr.bf16.gmra.mrb[0].mxu0 %v1043
    %v1078 = vpop.f32.mrb[0].mxu0
    %v1079 = vadd.f32 0.0, %v1078
    %v1080 = vpop.f32.mrb[0].mxu0
    %v1081 = vadd.f32 0.0, %v1080
    %v1082 = vpop.f32.mrb[0].mxu0
    %v1083 = vpop.f32.mrb[0].mxu0
    %1084 = vdwg.mxu0
    %1085 = vmatprep.subr.bf16.mxu0 %v331
    %1086 = vmatpush1.bf16.msra.mxu0 %v330
    %1087 = vmatprep.subr.bf16.mxu0 %v335
    %1088 = vmatpush1.bf16.msra.mxu0 %v334
    %1089 = vmatprep.subr.bf16.mxu0 %v339
    %1090 = vmatpush1.bf16.msra.mxu0 %v338
    %1091 = vmatprep.subr.bf16.mxu0 %v343
    %1092 = vmatpush1.bf16.msra.mxu0 %v342
    %1093 = vmatprep.subr.bf16.mxu0 %v347
    %1094 = vmatpush1.bf16.msra.mxu0 %v346
    %1095 = vmatprep.subr.bf16.mxu0 %v351
    %1096 = vmatpush1.bf16.msra.mxu0 %v350
    %1097 = vmatprep.subr.bf16.mxu0 %v355
    %1098 = vmatpush1.bf16.msra.mxu0 %v354
    %1099 = vmatprep.subr.bf16.mxu0 %v359
    %1100 = vmatpush1.bf16.msra.mxu0 %v358
    %1101 = vmatprep.subr.bf16.mxu0 0
    %1102 = vmatpush1.bf16.msra.mxu0 0
    %1103 = vmatprep.subr.bf16.mxu0 0
    %1104 = vmatpush1.bf16.msra.mxu0 0
    %1105 = vmatprep.subr.bf16.mxu0 0
    %1106 = vmatpush1.bf16.msra.mxu0 0
    %1107 = vmatprep.subr.bf16.mxu0 0
    %1108 = vmatpush1.bf16.msra.mxu0 0
    %1109 = vmatprep.subr.bf16.mxu0 0
    %1110 = vmatpush1.bf16.msra.mxu0 0
    %1111 = vmatprep.subr.bf16.mxu0 0
    %1112 = vmatpush1.bf16.msra.mxu0 0
    %1113 = vmatprep.subr.bf16.mxu0 0
    %1114 = vmatpush1.bf16.msra.mxu0 0
    %1115 = vmatprep.subr.bf16.mxu0 0
    %1116 = vmatpush1.bf16.msra.mxu0 0
    %1117 = vmatprep.mubr.bf16.mxu0 0
    %1118 = vmatmul.mubr.bf16.gmra.mrb[0].mxu0 %v1043
    %v1119 = vpop.f32.mrb[0].mxu0
    %v1120 = vadd.f32 0.0, %v1119
    %v1121 = vpop.f32.mrb[0].mxu0
    %v1122 = vadd.f32 0.0, %v1121
    %v1123 = vpop.f32.mrb[0].mxu0
    %v1124 = vpop.f32.mrb[0].mxu0
    %1125 = vdwg.mxu0
    %v1130 = vcombine.low %v1079, %v1081
    %v1131 = vcombine.low %v1120, %v1122
    %v1133 = vunpack.c.l.s4 1983009808
    %v1134 = vunpack.c.0.s8 %v1133
    %v1135 = vlaneseq
    %v1136 = vshrl.u32 %v1135, 7
    %v1137 = vsub.s32 %v1134, %v1136
    %v1138 = vrot.slane %v1130, %v1137
    %v1140 = vunpack.c.l.s4 1983009808
    %v1141 = vunpack.c.0.s8 %v1140
    %v1142 = vlaneseq
    %v1143 = vshrl.u32 %v1142, 7
    %v1144 = vsub.s32 %v1141, %v1143
    %v1145 = vrot.slane %v1131, %v1144
    %v1146 = vcombine.low %v1138, %v1145
    %v1148 = vadd.f32 %v1042, %v1146
    %v1149 = vsub.f32 0.0, %v1148
    %v1150 = vmul.f32 %v1149, 1.442695
    %v1151 = vpow.pop %v1150
    %v1152 = vadd.f32 %v1151, 1.0
    %v1153 = vrcp.pop %v1152
    %v1155 = vrot.slane %v1148, 2
    %v1157 = vsub.f32 0.0, %v1155
    %v1158 = vmul.f32 %v1157, 1.442695
    %v1159 = vpow.pop %v1158
    %v1160 = vadd.f32 %v1159, 1.0
    %v1161 = vrcp.pop %v1160
    %v1162 = vrot.slane %v1148, 4
    %v1164 = vtanh.pop %v1162
    %v1165 = vrot.slane %v1148, 6
    %v1167 = vsub.f32 0.0, %v1165
    %v1168 = vmul.f32 %v1167, 1.442695
    %v1169 = vpow.pop %v1168
    %v1170 = vadd.f32 %v1169, 1.0
    %v1171 = vrcp.pop %v1170
    %v1172 = vmul.f32 %v1161, %v1038
    %v1173 = vmul.f32 %v1153, %v1164
    %v1174 = vadd.f32 %v1172, %v1173
    %v1175 = vtanh.pop %v1174
    %v1176 = vmul.f32 %v1171, %v1175
    %s1177 = scalar_lea.vmem %s0, 48
    %v1178 = vld [vmem:[%s1177] sm:$0xff]
    %v1179 = vpack.c.bf16 %v1176, %v1176
    %1180 = vmatprep.subr.bf16.mxu0 %v329
    %1181 = vmatpush1.bf16.msra.mxu0 %v328
    %1182 = vmatprep.subr.bf16.mxu0 %v333
    %1183 = vmatpush1.bf16.msra.mxu0 %v332
    %1184 = vmatprep.subr.bf16.mxu0 %v337
    %1185 = vmatpush1.bf16.msra.mxu0 %v336
    %1186 = vmatprep.subr.bf16.mxu0 %v341
    %1187 = vmatpush1.bf16.msra.mxu0 %v340
    %1188 = vmatprep.subr.bf16.mxu0 %v345
    %1189 = vmatpush1.bf16.msra.mxu0 %v344
    %1190 = vmatprep.subr.bf16.mxu0 %v349
    %1191 = vmatpush1.bf16.msra.mxu0 %v348
    %1192 = vmatprep.subr.bf16.mxu0 %v353
    %1193 = vmatpush1.bf16.msra.mxu0 %v352
    %1194 = vmatprep.subr.bf16.mxu0 %v357
    %1195 = vmatpush1.bf16.msra.mxu0 %v356
    %1196 = vmatprep.subr.bf16.mxu0 0
    %1197 = vmatpush1.bf16.msra.mxu0 0
    %1198 = vmatprep.subr.bf16.mxu0 0
    %1199 = vmatpush1.bf16.msra.mxu0 0
    %1200 = vmatprep.subr.bf16.mxu0 0
    %1201 = vmatpush1.bf16.msra.mxu0 0
    %1202 = vmatprep.subr.bf16.mxu0 0
    %1203 = vmatpush1.bf16.msra.mxu0 0
    %1204 = vmatprep.subr.bf16.mxu0 0
    %1205 = vmatpush1.bf16.msra.mxu0 0
    %1206 = vmatprep.subr.bf16.mxu0 0
    %1207 = vmatpush1.bf16.msra.mxu0 0
    %1208 = vmatprep.subr.bf16.mxu0 0
    %1209 = vmatpush1.bf16.msra.mxu0 0
    %1210 = vmatprep.subr.bf16.mxu0 0
    %1211 = vmatpush1.bf16.msra.mxu0 0
    %1212 = vmatprep.mubr.bf16.mxu0 0
    %1213 = vmatmul.mubr.bf16.gmra.mrb[0].mxu0 %v1179
    %v1214 = vpop.f32.mrb[0].mxu0
    %v1215 = vadd.f32 0.0, %v1214
    %v1216 = vpop.f32.mrb[0].mxu0
    %v1217 = vadd.f32 0.0, %v1216
    %v1218 = vpop.f32.mrb[0].mxu0
    %v1219 = vpop.f32.mrb[0].mxu0
    %1220 = vdwg.mxu0
    %1221 = vmatprep.subr.bf16.mxu0 %v331
    %1222 = vmatpush1.bf16.msra.mxu0 %v330
    %1223 = vmatprep.subr.bf16.mxu0 %v335
    %1224 = vmatpush1.bf16.msra.mxu0 %v334
    %1225 = vmatprep.subr.bf16.mxu0 %v339
    %1226 = vmatpush1.bf16.msra.mxu0 %v338
    %1227 = vmatprep.subr.bf16.mxu0 %v343
    %1228 = vmatpush1.bf16.msra.mxu0 %v342
    %1229 = vmatprep.subr.bf16.mxu0 %v347
    %1230 = vmatpush1.bf16.msra.mxu0 %v346
    %1231 = vmatprep.subr.bf16.mxu0 %v351
    %1232 = vmatpush1.bf16.msra.mxu0 %v350
    %1233 = vmatprep.subr.bf16.mxu0 %v355
    %1234 = vmatpush1.bf16.msra.mxu0 %v354
    %1235 = vmatprep.subr.bf16.mxu0 %v359
    %1236 = vmatpush1.bf16.msra.mxu0 %v358
    %1237 = vmatprep.subr.bf16.mxu0 0
    %1238 = vmatpush1.bf16.msra.mxu0 0
    %1239 = vmatprep.subr.bf16.mxu0 0
    %1240 = vmatpush1.bf16.msra.mxu0 0
    %1241 = vmatprep.subr.bf16.mxu0 0
    %1242 = vmatpush1.bf16.msra.mxu0 0
    %1243 = vmatprep.subr.bf16.mxu0 0
    %1244 = vmatpush1.bf16.msra.mxu0 0
    %1245 = vmatprep.subr.bf16.mxu0 0
    %1246 = vmatpush1.bf16.msra.mxu0 0
    %1247 = vmatprep.subr.bf16.mxu0 0
    %1248 = vmatpush1.bf16.msra.mxu0 0
    %1249 = vmatprep.subr.bf16.mxu0 0
    %1250 = vmatpush1.bf16.msra.mxu0 0
    %1251 = vmatprep.subr.bf16.mxu0 0
    %1252 = vmatpush1.bf16.msra.mxu0 0
    %1253 = vmatprep.mubr.bf16.mxu0 0
    %1254 = vmatmul.mubr.bf16.gmra.mrb[0].mxu0 %v1179
    %v1255 = vpop.f32.mrb[0].mxu0
    %v1256 = vadd.f32 0.0, %v1255
    %v1257 = vpop.f32.mrb[0].mxu0
    %v1258 = vadd.f32 0.0, %v1257
    %v1259 = vpop.f32.mrb[0].mxu0
    %v1260 = vpop.f32.mrb[0].mxu0
    %1261 = vdwg.mxu0
    %v1266 = vcombine.low %v1215, %v1217
    %v1267 = vcombine.low %v1256, %v1258
    %v1269 = vunpack.c.l.s4 1983009808
    %v1270 = vunpack.c.0.s8 %v1269
    %v1271 = vlaneseq
    %v1272 = vshrl.u32 %v1271, 7
    %v1273 = vsub.s32 %v1270, %v1272
    %v1274 = vrot.slane %v1266, %v1273
    %v1276 = vunpack.c.l.s4 1983009808
    %v1277 = vunpack.c.0.s8 %v1276
    %v1278 = vlaneseq
    %v1279 = vshrl.u32 %v1278, 7
    %v1280 = vsub.s32 %v1277, %v1279
    %v1281 = vrot.slane %v1267, %v1280
    %v1282 = vcombine.low %v1274, %v1281
    %v1284 = vadd.f32 %v1178, %v1282
    %v1285 = vsub.f32 0.0, %v1284
    %v1286 = vmul.f32 %v1285, 1.442695
    %v1287 = vpow.pop %v1286
    %v1288 = vadd.f32 %v1287, 1.0
    %v1289 = vrcp.pop %v1288
    %v1291 = vrot.slane %v1284, 2
    %v1293 = vsub.f32 0.0, %v1291
    %v1294 = vmul.f32 %v1293, 1.442695
    %v1295 = vpow.pop %v1294
    %v1296 = vadd.f32 %v1295, 1.0
    %v1297 = vrcp.pop %v1296
    %v1298 = vrot.slane %v1284, 4
    %v1300 = vtanh.pop %v1298
    %v1301 = vrot.slane %v1284, 6
    %v1303 = vsub.f32 0.0, %v1301
    %v1304 = vmul.f32 %v1303, 1.442695
    %v1305 = vpow.pop %v1304
    %v1306 = vadd.f32 %v1305, 1.0
    %v1307 = vrcp.pop %v1306
    %v1308 = vmul.f32 %v1297, %v1174
    %v1309 = vmul.f32 %v1289, %v1300
    %v1310 = vadd.f32 %v1308, %v1309
    %v1311 = vtanh.pop %v1310
    %v1312 = vmul.f32 %v1307, %v1311
    %s1313 = scalar_lea.vmem %s0, 56
    %v1314 = vld [vmem:[%s1313] sm:$0xff]
    %v1315 = vpack.c.bf16 %v1312, %v1312
    %1316 = vmatprep.subr.bf16.mxu0 %v329
    %1317 = vmatpush1.bf16.msra.mxu0 %v328
    %1318 = vmatprep.subr.bf16.mxu0 %v333
    %1319 = vmatpush1.bf16.msra.mxu0 %v332
    %1320 = vmatprep.subr.bf16.mxu0 %v337
    %1321 = vmatpush1.bf16.msra.mxu0 %v336
    %1322 = vmatprep.subr.bf16.mxu0 %v341
    %1323 = vmatpush1.bf16.msra.mxu0 %v340
    %1324 = vmatprep.subr.bf16.mxu0 %v345
    %1325 = vmatpush1.bf16.msra.mxu0 %v344
    %1326 = vmatprep.subr.bf16.mxu0 %v349
    %1327 = vmatpush1.bf16.msra.mxu0 %v348
    %1328 = vmatprep.subr.bf16.mxu0 %v353
    %1329 = vmatpush1.bf16.msra.mxu0 %v352
    %1330 = vmatprep.subr.bf16.mxu0 %v357
    %1331 = vmatpush1.bf16.msra.mxu0 %v356
    %1332 = vmatprep.subr.bf16.mxu0 0
    %1333 = vmatpush1.bf16.msra.mxu0 0
    %1334 = vmatprep.subr.bf16.mxu0 0
    %1335 = vmatpush1.bf16.msra.mxu0 0
    %1336 = vmatprep.subr.bf16.mxu0 0
    %1337 = vmatpush1.bf16.msra.mxu0 0
    %1338 = vmatprep.subr.bf16.mxu0 0
    %1339 = vmatpush1.bf16.msra.mxu0 0
    %1340 = vmatprep.subr.bf16.mxu0 0
    %1341 = vmatpush1.bf16.msra.mxu0 0
    %1342 = vmatprep.subr.bf16.mxu0 0
    %1343 = vmatpush1.bf16.msra.mxu0 0
    %1344 = vmatprep.subr.bf16.mxu0 0
    %1345 = vmatpush1.bf16.msra.mxu0 0
    %1346 = vmatprep.subr.bf16.mxu0 0
    %1347 = vmatpush1.bf16.msra.mxu0 0
    %1348 = vmatprep.mubr.bf16.mxu0 0
    %1349 = vmatmul.mubr.bf16.gmra.mrb[0].mxu0 %v1315
    %v1350 = vpop.f32.mrb[0].mxu0
    %v1351 = vadd.f32 0.0, %v1350
    %v1352 = vpop.f32.mrb[0].mxu0
    %v1353 = vadd.f32 0.0, %v1352
    %v1354 = vpop.f32.mrb[0].mxu0
    %v1355 = vpop.f32.mrb[0].mxu0
    %1356 = vdwg.mxu0
    %1357 = vmatprep.subr.bf16.mxu0 %v331
    %1358 = vmatpush1.bf16.msra.mxu0 %v330
    %1359 = vmatprep.subr.bf16.mxu0 %v335
    %1360 = vmatpush1.bf16.msra.mxu0 %v334
    %1361 = vmatprep.subr.bf16.mxu0 %v339
    %1362 = vmatpush1.bf16.msra.mxu0 %v338
    %1363 = vmatprep.subr.bf16.mxu0 %v343
    %1364 = vmatpush1.bf16.msra.mxu0 %v342
    %1365 = vmatprep.subr.bf16.mxu0 %v347
    %1366 = vmatpush1.bf16.msra.mxu0 %v346
    %1367 = vmatprep.subr.bf16.mxu0 %v351
    %1368 = vmatpush1.bf16.msra.mxu0 %v350
    %1369 = vmatprep.subr.bf16.mxu0 %v355
    %1370 = vmatpush1.bf16.msra.mxu0 %v354
    %1371 = vmatprep.subr.bf16.mxu0 %v359
    %1372 = vmatpush1.bf16.msra.mxu0 %v358
    %1373 = vmatprep.subr.bf16.mxu0 0
    %1374 = vmatpush1.bf16.msra.mxu0 0
    %1375 = vmatprep.subr.bf16.mxu0 0
    %1376 = vmatpush1.bf16.msra.mxu0 0
    %1377 = vmatprep.subr.bf16.mxu0 0
    %1378 = vmatpush1.bf16.msra.mxu0 0
    %1379 = vmatprep.subr.bf16.mxu0 0
    %1380 = vmatpush1.bf16.msra.mxu0 0
    %1381 = vmatprep.subr.bf16.mxu0 0
    %1382 = vmatpush1.bf16.msra.mxu0 0
    %1383 = vmatprep.subr.bf16.mxu0 0
    %1384 = vmatpush1.bf16.msra.mxu0 0
    %1385 = vmatprep.subr.bf16.mxu0 0
    %1386 = vmatpush1.bf16.msra.mxu0 0
    %1387 = vmatprep.subr.bf16.mxu0 0
    %1388 = vmatpush1.bf16.msra.mxu0 0
    %1389 = vmatprep.mubr.bf16.mxu0 0
    %1390 = vmatmul.mubr.bf16.gmra.mrb[0].mxu0 %v1315
    %v1391 = vpop.f32.mrb[0].mxu0
    %v1392 = vadd.f32 0.0, %v1391
    %v1393 = vpop.f32.mrb[0].mxu0
    %v1394 = vadd.f32 0.0, %v1393
    %v1395 = vpop.f32.mrb[0].mxu0
    %v1396 = vpop.f32.mrb[0].mxu0
    %1397 = vdwg.mxu0
    %v1402 = vcombine.low %v1351, %v1353
    %v1403 = vcombine.low %v1392, %v1394
    %v1405 = vunpack.c.l.s4 1983009808
    %v1406 = vunpack.c.0.s8 %v1405
    %v1407 = vlaneseq
    %v1408 = vshrl.u32 %v1407, 7
    %v1409 = vsub.s32 %v1406, %v1408
    %v1410 = vrot.slane %v1402, %v1409
    %v1412 = vunpack.c.l.s4 1983009808
    %v1413 = vunpack.c.0.s8 %v1412
    %v1414 = vlaneseq
    %v1415 = vshrl.u32 %v1414, 7
    %v1416 = vsub.s32 %v1413, %v1415
    %v1417 = vrot.slane %v1403, %v1416
    %v1418 = vcombine.low %v1410, %v1417
    %v1420 = vadd.f32 %v1314, %v1418
    %v1421 = vsub.f32 0.0, %v1420
    %v1422 = vmul.f32 %v1421, 1.442695
    %v1423 = vpow.pop %v1422
    %v1424 = vadd.f32 %v1423, 1.0
    %v1425 = vrcp.pop %v1424
    %v1427 = vrot.slane %v1420, 2
    %v1429 = vsub.f32 0.0, %v1427
    %v1430 = vmul.f32 %v1429, 1.442695
    %v1431 = vpow.pop %v1430
    %v1432 = vadd.f32 %v1431, 1.0
    %v1433 = vrcp.pop %v1432
    %v1434 = vrot.slane %v1420, 4
    %v1436 = vtanh.pop %v1434
    %v1437 = vrot.slane %v1420, 6
    %v1439 = vsub.f32 0.0, %v1437
    %v1440 = vmul.f32 %v1439, 1.442695
    %v1441 = vpow.pop %v1440
    %v1442 = vadd.f32 %v1441, 1.0
    %v1443 = vrcp.pop %v1442
    %v1444 = vmul.f32 %v1433, %v1310
    %v1445 = vmul.f32 %v1425, %v1436
    %v1446 = vadd.f32 %v1444, %v1445
    %v1447 = vtanh.pop %v1446
    %v1448 = vmul.f32 %v1443, %v1447
    %1449 = vst [vmem:[#allocation4] sm:$0x3] %v1448
    %1450 = vst [vmem:[#allocation5] sm:$0x3] %v1446
    // Predicated region
    $region47: #{lstm_pallas.1} parent=1 // pred_check
      %p1451 = pneg %p14
    $region48: #{lstm_pallas.1} parent=1 // pred_check_branch
      %1453 = sbr.rel (%p1451) target = $region50
    $region49: #{lstm_pallas.1} parent=1 // pred_region
      %1454 = vst [vmem:[#allocation6] sm:$0x3] %v1448
      %1455 = vst [vmem:[#allocation8] sm:$0x3] %v1446
    $region50: #{lstm_pallas.1} parent=1 // pred_fallthru
      _
    // Predicated region
    $region51: #{lstm_pallas.1} parent=1 // pred_check
      _
    $region52: #{lstm_pallas.1} parent=1 // pred_check_branch
      %1457 = sbr.rel (0) target = $region54
    $region53: #{lstm_pallas.1} parent=1 // pred_region
      %s1459 = ssub.s32 32, 32
      %1460 = vsyncadd [#allocation7], %s1459
      %s1462 = sshll.u32 [#allocation6], 4
      %s1463 = int_to_ptr.vmem [resolvable:$true] %s1462
      %1465 = dma.vmem_to_hbm [thread:$0]  %s1463, 32, %s2, [#allocation7]
    $region54: #{lstm_pallas.1} parent=1 // pred_fallthru
      _
    // Predicated region
    $region55: #{lstm_pallas.1} parent=1 // pred_check
      _
    $region56: #{lstm_pallas.1} parent=1 // pred_check_branch
      %1467 = sbr.rel (0) target = $region58
    $region57: #{lstm_pallas.1} parent=1 // pred_region
      %s1469 = ssub.s32 32, 32
      %1470 = vsyncadd [#allocation9], %s1469
      %s1472 = sshll.u32 [#allocation8], 4
      %s1473 = int_to_ptr.vmem [resolvable:$true] %s1472
      %1475 = dma.vmem_to_hbm [thread:$0]  %s1473, 32, %s3, [#allocation9]
    $region58: #{lstm_pallas.1} parent=1 // pred_fallthru
      _
    // Predicated region
    $region59: #{lstm_pallas.1} parent=1 // pred_check
      _
    $region60: #{lstm_pallas.1} parent=1 // pred_check_branch
      %1477 = sbr.rel (0) target = $region62
    $region61: #{lstm_pallas.1} parent=1 // pred_region
      %1478 = dma.done [#allocation7], 32
    $region62: #{lstm_pallas.1} parent=1 // pred_fallthru
      _
    // Predicated region
    $region63: #{lstm_pallas.1} parent=1 // pred_check
      _
    $region64: #{lstm_pallas.1} parent=1 // pred_check_branch
      %1480 = sbr.rel (0) target = $region66
    $region65: #{lstm_pallas.1} parent=1 // pred_region
      %1481 = dma.done [#allocation9], 32
    $region66: #{lstm_pallas.1} parent=1 // pred_fallthru
      _
    %1482 = vsyncpa [#allocation7], 1
    %1483 = vsyncpa [#allocation9], 1
  %1484 = vsyncmov [#allocation3]
  %s1485 = vpop.sfrf %1484
  %p1486 = scmp.eq.s32.totalorder %s1485, 0
  %p1487 = pneg %p1486
  %1489 = shalt.err (%p1487)

</llo_original>
